<compile_context>
chip_gen: v5e
topology: v5e:2x2
jax: 0.10.0
libtpu: 0.0.40
codegen_flags: <defaults>
</compile_context>

<pallas_src>
import functools

import jax
import jax.numpy as jnp
from jax.experimental import pallas as pl
from jax.experimental.pallas import tpu as pltpu


# ---------------------------------------------------------------------------
# Kernel body
# ---------------------------------------------------------------------------
def _residual_mlp_kernel(x_ref, w1_ref, b1_ref, w2_ref, b2_ref, o_ref):
    """o = GELU(x @ W1 + b1) @ W2 + b2 + x ; native-dtype MXU, f32 accumulate."""
    # First matmul: operands stay in their native dtype (bf16 -> full MXU
    # rate), accumulation in f32.
    h = jnp.dot(x_ref[...], w1_ref[...], preferred_element_type=jnp.float32)

    b1 = b1_ref[...]
    if b1.dtype != jnp.float32:          # no-op when bias is already f32
        b1 = b1.astype(jnp.float32)
    h = jax.nn.gelu(h + b1)              # EUP/VPU epilogue on the f32 [tm, H]

    # Second matmul: cast activations down to the weight dtype so the MXU
    # runs at bf16 rate again; accumulate in f32.
    y = jnp.dot(h.astype(w2_ref.dtype), w2_ref[...],
                preferred_element_type=jnp.float32)      # [tm, D] f32

    b2 = b2_ref[...]
    if b2.dtype != jnp.float32:
        b2 = b2.astype(jnp.float32)

    # Residual.forward: fn(x) + x.  x is re-read from VMEM only here.
    o_ref[...] = (y + b2 + x_ref[...].astype(jnp.float32)).astype(o_ref.dtype)


# ---------------------------------------------------------------------------
# Generation-aware sizing helpers
# ---------------------------------------------------------------------------
@functools.lru_cache(maxsize=1)
def _vmem_capacity_bytes():
    """Physical per-core VMEM; conservative 64 MiB fallback (v7x)."""
    try:
        return int(pltpu.get_tpu_info().vmem_capacity_bytes)
    except Exception:  # noqa: BLE001 - info query is best-effort
        return 64 * 2 ** 20


@functools.lru_cache(maxsize=1)
def _single_buffer_supported():
    """One-time probe: does this JAX/Mosaic accept pl.Buffered(1) specs?"""
    try:
        def _k(x_ref, o_ref):
            o_ref[...] = x_ref[...]

        out = pl.pallas_call(
            _k,
            out_shape=jax.ShapeDtypeStruct((8, 128), jnp.float32),
            grid=(2,),
            in_specs=[pl.BlockSpec((8, 128), lambda i: (0, 0),
                                   pipeline_mode=pl.Buffered(1))],
            out_specs=pl.BlockSpec((8, 128), lambda i: (0, 0)),
        )(jnp.zeros((8, 128), jnp.float32))
        jax.block_until_ready(out)
        return True
    except Exception:  # noqa: BLE001 - fall back to default double-buffering
        return False


def _vmem_estimate(tm, D, H, x_bytes, w_bytes, b_bytes, out_bytes,
                   single_buffer):
    """Exact VMEM footprint for one grid step (bytes)."""
    w_copies = 1 if single_buffer else 2
    weights = w_copies * (2 * D * H * w_bytes + (H + D) * b_bytes)
    streamed = 2 * tm * D * (x_bytes + out_bytes)          # double-buffered x/out
    # f32 [tm,H] h  +  its down-cast copy for the 2nd matmul  +  f32 [tm,D] y
    interm = tm * H * (4 + w_bytes) + tm * D * 4
    return weights + streamed + interm


def _pick_tile_rows(T, D, H, x_bytes, w_bytes, b_bytes, out_bytes,
                    single_buffer):
    cap = _vmem_capacity_bytes()
    budget = cap - (12 << 20)                  # headroom for compiler scratch
    # 128 MiB parts (v5e/v6e) can take 1024-row tiles; 64 MiB (v7x) tops at 512.
    cands = ((1024, 512, 256, 128, 64, 32, 16, 8) if cap >= (100 << 20)
             else (512, 256, 128, 64, 32, 16, 8))
    fits = [c for c in cands
            if T % c == 0
            and _vmem_estimate(c, D, H, x_bytes, w_bytes, b_bytes, out_bytes,
                               single_buffer) <= budget]
    if not fits:
        return T
    # Prefer >=4 grid steps with an even step count (pipelined, no idle TC on
    # the tail step), then >=4, then >=2, then the largest tile that fits.
    for pred in (lambda c: T // c >= 4 and (T // c) % 2 == 0,
                 lambda c: T // c >= 4,
                 lambda c: T // c >= 2,
                 lambda c: True):
        for c in fits:                          # fits is largest-first
            if pred(c):
                return c
    return T


# ---------------------------------------------------------------------------
# pallas_call builder (cached: built once per unique shape/dtype/tile combo)
# ---------------------------------------------------------------------------
@functools.lru_cache(maxsize=None)
def _build_call(T, D, H, tm, x_dtype, w_dtype, b_dtype, out_dtype,
                single_buffer):
    x_dtype = jnp.dtype(x_dtype)
    w_dtype = jnp.dtype(w_dtype)
    b_dtype = jnp.dtype(b_dtype)
    out_dtype = jnp.dtype(out_dtype)
    x_bytes, w_bytes, b_bytes, out_bytes = (
        x_dtype.itemsize, w_dtype.itemsize, b_dtype.itemsize, out_dtype.itemsize)

    # Weights/biases have a constant index_map -> single-buffer them to avoid
    # a wasted second VMEM copy (when supported).
    w_kwargs = {"pipeline_mode": pl.Buffered(1)} if single_buffer else {}

    est = _vmem_estimate(tm, D, H, x_bytes, w_bytes, b_bytes, out_bytes,
                         single_buffer)
    cap = _vmem_capacity_bytes()
    vmem_limit = int(max(min(est + (4 << 20), cap - (8 << 20)), 16 << 20))

    cost = pl.CostEstimate(
        flops=4 * T * D * H + 2 * T * (H + D),
        transcendentals=T * H,                              # GELU
        bytes_accessed=T * D * (x_bytes + out_bytes)
                       + 2 * D * H * w_bytes + (H + D) * b_bytes)

    return pl.pallas_call(
        _residual_mlp_kernel,
        out_shape=jax.ShapeDtypeStruct((T, D), out_dtype),
        grid_spec=pltpu.PrefetchScalarGridSpec(
            num_scalar_prefetch=0,
            grid=(T // tm,),
            in_specs=[
                pl.BlockSpec((tm, D), lambda i: (i, 0)),             # x tile
                pl.BlockSpec((D, H), lambda i: (0, 0), **w_kwargs),  # W1 resident
                pl.BlockSpec((1, H), lambda i: (0, 0), **w_kwargs),  # b1
                pl.BlockSpec((H, D), lambda i: (0, 0), **w_kwargs),  # W2 resident
                pl.BlockSpec((1, D), lambda i: (0, 0), **w_kwargs),  # b2
            ],
            out_specs=pl.BlockSpec((tm, D), lambda i: (i, 0)),
        ),
        compiler_params=pltpu.CompilerParams(
            dimension_semantics=("parallel",),     # shard row tiles across TCs
            vmem_limit_bytes=vmem_limit),
        cost_estimate=cost,
    )


def residual_mlp(x, w1, b1, w2, b2, *, tile_rows=None):
    """Residual(FeedForward): fn(x) + x with fn = Linear -> GELU -> Linear.

    x: [B, N, D]; w1: [D, H]; b1: [1, H]; w2: [H, D]; b2: [1, D].
    For best MXU utilization on v6e/v7x keep D and H multiples of 256
    (lane-dense output, full 256-wide systolic tiles) and pass x / W in bf16
    (f32 accumulation is done inside the kernel).
    """
    B, N, D = x.shape
    H = w1.shape[1]
    T = B * N
    x2d = x.reshape(T, D)

    single_buffer = _single_buffer_supported()
    x_bytes = jnp.dtype(x.dtype).itemsize
    w_bytes = jnp.dtype(w1.dtype).itemsize
    b_bytes = jnp.dtype(b1.dtype).itemsize

    tm = (_pick_tile_rows(T, D, H, x_bytes, w_bytes, b_bytes, x_bytes,
                          single_buffer)
          if tile_rows is None else tile_rows)
    assert T % tm == 0, f"row count {T} must be divisible by tile_rows {tm}"

    call = _build_call(T, D, H, tm,
                       jnp.dtype(x.dtype).name, jnp.dtype(w1.dtype).name,
                       jnp.dtype(b1.dtype).name, jnp.dtype(x.dtype).name,
                       single_buffer)
    out2d = call(x2d, w1, b1, w2, b2)          # no device sync in the hot path
    return out2d.reshape(B, N, D)


if __name__ == "__main__":
    key = jax.random.PRNGKey(0)
    # Small but MXU-friendly shapes: D, H multiples of 256; T = B*N = 512 rows
    # -> 128-row tile, 4 even grid steps (pipelined, megacore-shardable).
    B, N, D, H = 2, 256, 256, 512
    kx, k1, k2 = jax.random.split(key, 3)

    # bf16 activations/weights (MXU-native); f32 biases / epilogue.
    x = jax.random.normal(kx, (B, N, D), dtype=jnp.float32).astype(jnp.bfloat16)
    w1 = (jax.random.normal(k1, (D, H), dtype=jnp.float32)
          * (1.0 / jnp.sqrt(D))).astype(jnp.bfloat16)
    b1 = jnp.zeros((1, H), dtype=jnp.float32)
    w2 = (jax.random.normal(k2, (H, D), dtype=jnp.float32)
          * (1.0 / jnp.sqrt(H))).astype(jnp.bfloat16)
    b2 = jnp.zeros((1, D), dtype=jnp.float32)

    out = residual_mlp(x, w1, b1, w2, b2)
    jax.block_until_ready(out)

    # Reference: fn(x) + x in plain JAX, f32 math (tolerance covers bf16 I/O).
    x32, w1_32, w2_32 = (a.astype(jnp.float32) for a in (x, w1, w2))
    ref = (jax.nn.gelu(x32 @ w1_32 + b1[0]) @ w2_32 + b2[0]) + x32
    assert jnp.allclose(out.astype(jnp.float32), ref, atol=6e-2, rtol=6e-2), \
        "mismatch vs reference"

    print("KERNEL_OK")
</pallas_src>

<mosaic_0001>
module attributes {stable_mosaic.version = 11 : i64} {
  func.func @_k(%arg0: i32, %arg1: memref<8x128xf32, #tpu.memory_space<vmem>>, %arg2: memref<8x128xf32, #tpu.memory_space<vmem>>) attributes {dimension_semantics = [#tpu.dimension_semantics<arbitrary>], iteration_bounds = array<i64: 2>, scalar_prefetch = 0 : i64, scratch_operands = 0 : i64, tpu.core_type = #tpu.core_type<tc>, window_params = [{pipeline_mode = #tpu.pipeline_mode<synchronous>, transform_indices = @transform_0, window_bounds = array<i64: 8, 128>}, {pipeline_mode = #tpu.pipeline_mode<synchronous>, transform_indices = @transform_1, window_bounds = array<i64: 8, 128>}]} {
    %c0 = arith.constant 0 : index
    %c0_0 = arith.constant 0 : index
    %0 = vector.load %arg1[%c0, %c0_0] : memref<8x128xf32, #tpu.memory_space<vmem>>, vector<8x128xf32>
    %c0_1 = arith.constant 0 : index
    %c0_2 = arith.constant 0 : index
    %1 = vector.load %arg2[%c0_1, %c0_2] : memref<8x128xf32, #tpu.memory_space<vmem>>, vector<8x128xf32>
    tpu.vector_store %arg2[%c0_1, %c0_2], %0 {strides = array<i32>} : memref<8x128xf32, #tpu.memory_space<vmem>>, vector<8x128xf32>,
    return
  }
  func.func @transform_0(%arg0: i32) -> (i32, i32) {
    %c0_i32 = arith.constant 0 : i32
    %c0_i32_0 = arith.constant 0 : i32
    %c0_i32_1 = arith.constant 0 : i32
    return %c0_i32, %c0_i32_0 : i32, i32
  }
  func.func @transform_1(%arg0: i32) -> (i32, i32) {
    %c0_i32 = arith.constant 0 : i32
    %c0_i32_0 = arith.constant 0 : i32
    %c0_i32_1 = arith.constant 0 : i32
    return %c0_i32, %c0_i32_0 : i32, i32
  }
}

module attributes {stable_mosaic.version = 11 : i64} {
  func.func @_residual_mlp_kernel(%arg0: i32, %arg1: memref<128x256xbf16, #tpu.memory_space<vmem>>, %arg2: memref<256x512xbf16, #tpu.memory_space<vmem>>, %arg3: memref<1x512xf32, #tpu.memory_space<vmem>>, %arg4: memref<512x256xbf16, #tpu.memory_space<vmem>>, %arg5: memref<1x256xf32, #tpu.memory_space<vmem>>, %arg6: memref<128x256xbf16, #tpu.memory_space<vmem>>) attributes {dimension_semantics = [#tpu.dimension_semantics<parallel>], iteration_bounds = array<i64: 4>, scalar_prefetch = 0 : i64, scratch_operands = 0 : i64, tpu.core_type = #tpu.core_type<tc>, window_params = [{transform_indices = @transform_0, window_bounds = array<i64: 128, 256>}, {pipeline_mode = #tpu.pipeline_mode<synchronous>, transform_indices = @transform_1, window_bounds = array<i64: 256, 512>}, {pipeline_mode = #tpu.pipeline_mode<synchronous>, transform_indices = @transform_2, window_bounds = array<i64: 1, 512>}, {pipeline_mode = #tpu.pipeline_mode<synchronous>, transform_indices = @transform_3, window_bounds = array<i64: 512, 256>}, {pipeline_mode = #tpu.pipeline_mode<synchronous>, transform_indices = @transform_4, window_bounds = array<i64: 1, 256>}, {transform_indices = @transform_5, window_bounds = array<i64: 128, 256>}]} {
    %c0 = arith.constant 0 : index
    %c0_0 = arith.constant 0 : index
    %0 = vector.load %arg1[%c0, %c0_0] : memref<128x256xbf16, #tpu.memory_space<vmem>>, vector<128x256xbf16>
    %c0_1 = arith.constant 0 : index
    %c0_2 = arith.constant 0 : index
    %1 = vector.load %arg2[%c0_1, %c0_2] : memref<256x512xbf16, #tpu.memory_space<vmem>>, vector<256x512xbf16>
    %cst = arith.constant dense<0.000000e+00> : vector<128x512xf32>
    %2 = tpu.matmul %0, %1, %cst {dimension_numbers = #tpu.dot_dimension_numbers<[1], [0], [0], [1], [0, 0, 1, 1], [], []>} : vector<128x256xbf16>, vector<256x512xbf16>, vector<128x512xf32> -> vector<128x512xf32>
    %c0_3 = arith.constant 0 : index
    %c0_4 = arith.constant 0 : index
    %3 = vector.load %arg3[%c0_3, %c0_4] : memref<1x512xf32, #tpu.memory_space<vmem>>, vector<1x512xf32>
    %4 = vector.broadcast %3 : vector<1x512xf32> to vector<128x512xf32>
    %5 = arith.addf %2, %4 : vector<128x512xf32>
    %6 = arith.mulf %5, %5 : vector<128x512xf32>
    %7 = arith.mulf %5, %6 : vector<128x512xf32>
    %cst_5 = arith.constant 4.471500e-02 : f32
    %8 = vector.broadcast %cst_5 : f32 to vector<128x512xf32>
    %9 = arith.mulf %8, %7 : vector<128x512xf32>
    %10 = arith.addf %5, %9 : vector<128x512xf32>
    %cst_6 = arith.constant 0.797884583 : f32
    %11 = vector.broadcast %cst_6 : f32 to vector<128x512xf32>
    %12 = arith.mulf %11, %10 : vector<128x512xf32>
    %13 = math.tanh %12 : vector<128x512xf32>
    %cst_7 = arith.constant 1.000000e+00 : f32
    %14 = vector.broadcast %cst_7 : f32 to vector<128x512xf32>
    %15 = arith.addf %14, %13 : vector<128x512xf32>
    %cst_8 = arith.constant 5.000000e-01 : f32
    %16 = vector.broadcast %cst_8 : f32 to vector<128x512xf32>
    %17 = arith.mulf %16, %15 : vector<128x512xf32>
    %18 = arith.mulf %5, %17 : vector<128x512xf32>
    %19 = arith.truncf %18 : vector<128x512xf32> to vector<128x512xbf16>
    %c0_9 = arith.constant 0 : index
    %c0_10 = arith.constant 0 : index
    %20 = vector.load %arg4[%c0_9, %c0_10] : memref<512x256xbf16, #tpu.memory_space<vmem>>, vector<512x256xbf16>
    %cst_11 = arith.constant dense<0.000000e+00> : vector<128x256xf32>
    %21 = tpu.matmul %19, %20, %cst_11 {dimension_numbers = #tpu.dot_dimension_numbers<[1], [0], [0], [1], [0, 0, 1, 1], [], []>} : vector<128x512xbf16>, vector<512x256xbf16>, vector<128x256xf32> -> vector<128x256xf32>
    %c0_12 = arith.constant 0 : index
    %c0_13 = arith.constant 0 : index
    %22 = vector.load %arg5[%c0_12, %c0_13] : memref<1x256xf32, #tpu.memory_space<vmem>>, vector<1x256xf32>
    %23 = vector.broadcast %22 : vector<1x256xf32> to vector<128x256xf32>
    %24 = arith.addf %21, %23 : vector<128x256xf32>
    %c0_14 = arith.constant 0 : index
    %c0_15 = arith.constant 0 : index
    %25 = vector.load %arg1[%c0_14, %c0_15] : memref<128x256xbf16, #tpu.memory_space<vmem>>, vector<128x256xbf16>
    %26 = arith.extf %25 : vector<128x256xbf16> to vector<128x256xf32>
    %27 = arith.addf %24, %26 : vector<128x256xf32>
    %28 = arith.truncf %27 : vector<128x256xf32> to vector<128x256xbf16>
    %c0_16 = arith.constant 0 : index
    %c0_17 = arith.constant 0 : index
    %29 = vector.load %arg6[%c0_16, %c0_17] : memref<128x256xbf16, #tpu.memory_space<vmem>>, vector<128x256xbf16>
    tpu.vector_store %arg6[%c0_16, %c0_17], %28 {strides = array<i32>} : memref<128x256xbf16, #tpu.memory_space<vmem>>, vector<128x256xbf16>,
    return
  }
  func.func @transform_0(%arg0: i32) -> (i32, i32) {
    %c0_i32 = arith.constant 0 : i32
    %c0_i32_0 = arith.constant 0 : i32
    return %arg0, %c0_i32 : i32, i32
  }
  func.func @transform_1(%arg0: i32) -> (i32, i32) {
    %c0_i32 = arith.constant 0 : i32
    %c0_i32_0 = arith.constant 0 : i32
    %c0_i32_1 = arith.constant 0 : i32
    return %c0_i32, %c0_i32_0 : i32, i32
  }
  func.func @transform_2(%arg0: i32) -> (i32, i32) {
    %c0_i32 = arith.constant 0 : i32
    %c0_i32_0 = arith.constant 0 : i32
    %c0_i32_1 = arith.constant 0 : i32
    return %c0_i32, %c0_i32_0 : i32, i32
  }
  func.func @transform_3(%arg0: i32) -> (i32, i32) {
    %c0_i32 = arith.constant 0 : i32
    %c0_i32_0 = arith.constant 0 : i32
    %c0_i32_1 = arith.constant 0 : i32
    return %c0_i32, %c0_i32_0 : i32, i32
  }
  func.func @transform_4(%arg0: i32) -> (i32, i32) {
    %c0_i32 = arith.constant 0 : i32
    %c0_i32_0 = arith.constant 0 : i32
    %c0_i32_1 = arith.constant 0 : i32
    return %c0_i32, %c0_i32_0 : i32, i32
  }
  func.func @transform_5(%arg0: i32) -> (i32, i32) {
    %c0_i32 = arith.constant 0 : i32
    %c0_i32_0 = arith.constant 0 : i32
    return %arg0, %c0_i32 : i32, i32
  }
}

</mosaic_0001>

<llo_original>
// kernel: tpu_custom_call.1
$region0: #{tpu_custom_call.1}
  #allocation0 [shape = 'u32[]', space=smem, size = 0x4, offset = 0x4, fixed_abs, tag = 'smem constant byte address 0x4 - core index']
  #allocation1 [shape = 'u32[72,128]{1,0:T(1,128)}', space=vmem, size = 0x9000, scoped, tag = 'internal scratch']
  %s0 = inlined_call_operand.hbm [shape: f32[8,128], index: 0, kind: input, shape index: {}]
  %s1 = inlined_call_operand.hbm [shape: f32[8,128], index: 1, kind: output, shape index: {}]
  %s2 = sld [smem:[#allocation0]]
  $region41: #{tpu_custom_call.1} parent=0
    _
  %s4 = ssub.s32 1, %s2
  %s5 = scalar_select 0, %s4, %s2
  $region1: #{tpu_custom_call.1} parent=0
    #allocation2 [shape = 'u8[4096]{0}', space=vmem, size = 0x1000, scoped, tag = 'input window, operand 0, single buffered']
    #allocation3 [shape = 's32[2]{0}', space=sflag, size = 0x8, scoped, tag = 'scoped memory for tpu_custom_call.1']
    #allocation4 [shape = 's32[2]{0}', space=sflag, size = 0x8, scoped, tag = 'scoped memory for tpu_custom_call.1']
    #allocation5 [shape = 'u8[4096]{0}', space=vmem, size = 0x1000, scoped, tag = 'output window, operand 0, single buffered']
    %6 = vsyncpa [#allocation3], 0
    %7 = vsyncpa [#allocation4], 0
    loop: start=0, step=1, limit=4
    $region2: #{tpu_custom_call.1} parent=1 // loop_pre_header
      _
    $region3: #{tpu_custom_call.1} parent=1 // loop_header
      %s9 = sphi 0, %s13
      %p10 = scmp.ge.s32.totalorder %s9, 4
      %s17 = sphi 0, %s17
      %s19 = sphi 0, %s17
      %s20 = sphi 0, %s19
      %s34 = sphi 0, %s20
      %s38 = sphi 0, %s38
      %s40 = sphi 0, %s38
      %s41 = sphi 0, %s40
      %s55 = sphi 0, %s41
    $region4: #{tpu_custom_call.1} parent=1 // loop_header_branch
      %12 = sbr.rel (%p10) target = $region8
    $region5: #{tpu_custom_call.1} parent=1 // loop_body
      %s14 = ssub.s32 %s9, 1
      %s15 = ssub.s32 %s9, 2
      %s16 = sadd.s32 %s9, 1
      %s18 = sadd.s32 %s17, 1
      %p21 = scmp.eq.s32.totalorder %s9, 1
      %p22 = scmp.ne.s32.totalorder %s17, %s19
      %p23 = scmp.eq.s32.totalorder %s9, 0
      %p24 = por %p22, %p23
      %p25 = scmp.ne.s32.totalorder %s17, %s19
      %p26 = scmp.eq.s32.totalorder %s14, 1
      %p27 = por %p25, %p26
      %p28 = scmp.ne.s32.totalorder %s19, %s20
      %p29 = scmp.eq.s32.totalorder %s14, 0
      %p30 = por %p28, %p29
      %p31 = scmp.ne.s32.totalorder %s19, %s20
      %p32 = scmp.eq.s32.totalorder %s15, 1
      %p33 = por %p31, %p32
      %p35 = scmp.ne.s32.totalorder %s20, %s34
      %p36 = scmp.eq.s32.totalorder %s15, 0
      %p37 = por %p35, %p36
      %s39 = sadd.s32 %s38, 1
      %p42 = scmp.eq.s32.totalorder %s9, 1
      %p43 = scmp.ne.s32.totalorder %s38, %s40
      %p44 = scmp.eq.s32.totalorder %s9, 0
      %p45 = por %p43, %p44
      %p46 = scmp.ne.s32.totalorder %s38, %s40
      %p47 = scmp.eq.s32.totalorder %s14, 1
      %p48 = por %p46, %p47
      %p49 = scmp.ne.s32.totalorder %s40, %s41
      %p50 = scmp.eq.s32.totalorder %s14, 0
      %p51 = por %p49, %p50
      %p52 = scmp.ne.s32.totalorder %s40, %s41
      %p53 = scmp.eq.s32.totalorder %s15, 1
      %p54 = por %p52, %p53
      %p56 = scmp.ne.s32.totalorder %s41, %s55
      %p57 = scmp.eq.s32.totalorder %s15, 0
      %p58 = por %p56, %p57
      %p59 = scmp.le.s32.totalorder 1, %s9
      %p60 = scmp.lt.s32.totalorder %s9, 3
      %p61 = pnand %p59, %p60
      %p62 = pneg %p61
      // Predicated region
      $region9: #{tpu_custom_call.1} parent=5 // pred_check
        _
      $region10: #{tpu_custom_call.1} parent=5 // pred_check_branch
        %64 = sbr.rel (%p61) target = $region12
      $region11: #{tpu_custom_call.1} parent=5 // pred_region
        %s65 = ssub.s32 %s9, 1
        // Predicated region
        $region13: #{tpu_custom_call.1} parent=11 // pred_check
          %p66 = pneg %p30
        $region14: #{tpu_custom_call.1} parent=11 // pred_check_branch
          %68 = sbr.rel (%p66) target = $region16
        $region15: #{tpu_custom_call.1} parent=11 // pred_region
          %70 = vsyncadd [#allocation3], 0
          %s72 = sshll.u32 %s0, 4
          %s73 = int_to_ptr.hbm [resolvable:$true] %s72
          %s74 = sshll.u32 [#allocation2], 4
          %s75 = int_to_ptr.vmem [resolvable:$true] %s74
          %77 = dma.hbm_to_vmem [thread:$0]  %s73, 128, %s75, [#allocation3]
        $region16: #{tpu_custom_call.1} parent=11 // pred_fallthru
          _
      $region12: #{tpu_custom_call.1} parent=5 // pred_fallthru
        _
      %p78 = scmp.lt.s32.totalorder %s9, 2
      // Predicated region
      $region17: #{tpu_custom_call.1} parent=5 // pred_check
        %p79 = pneg %p78
      $region18: #{tpu_custom_call.1} parent=5 // pred_check_branch
        %81 = sbr.rel (%p79) target = $region20
      $region19: #{tpu_custom_call.1} parent=5 // pred_region
        _
      $region20: #{tpu_custom_call.1} parent=5 // pred_fallthru
        _
      %p82 = scmp.le.s32.totalorder 1, %s9
      %p83 = scmp.lt.s32.totalorder %s9, 3
      %p84 = pnand %p82, %p83
      %p85 = pneg %p84
      // Predicated region
      $region21: #{tpu_custom_call.1} parent=5 // pred_check
        _
      $region22: #{tpu_custom_call.1} parent=5 // pred_check_branch
        %87 = sbr.rel (%p84) target = $region24
      $region23: #{tpu_custom_call.1} parent=5 // pred_region
        %s88 = ssub.s32 %s9, 1
        // Predicated region
        $region25: #{tpu_custom_call.1} parent=23 // pred_check
          %p89 = pneg %p30
        $region26: #{tpu_custom_call.1} parent=23 // pred_check_branch
          %91 = sbr.rel (%p89) target = $region28
        $region27: #{tpu_custom_call.1} parent=23 // pred_region
          %93 = dma.done [#allocation3], 128
        $region28: #{tpu_custom_call.1} parent=23 // pred_fallthru
          _
        %p94 = pneg %p30
        %p95 = pneg %p27
        %p96 = pneg %p51
        %p97 = pneg %p48
        %v98 = vld [vmem:[#allocation2] sm:$0xff]
        %99 = vst [vmem:[#allocation5] sm:$0xff] %v98
        // Predicated region
        $region29: #{tpu_custom_call.1} parent=23 // pred_check
          %p100 = pneg %p48
        $region30: #{tpu_custom_call.1} parent=23 // pred_check_branch
          %102 = sbr.rel (%p100) target = $region32
        $region31: #{tpu_custom_call.1} parent=23 // pred_region
          %104 = vsyncadd [#allocation4], 0
          %s106 = sshll.u32 [#allocation5], 4
          %s107 = int_to_ptr.vmem [resolvable:$true] %s106
          %s108 = sshll.u32 %s1, 4
          %s109 = int_to_ptr.hbm [resolvable:$true] %s108
          %111 = dma.vmem_to_hbm [thread:$0]  %s107, 128, %s109, [#allocation4]
        $region32: #{tpu_custom_call.1} parent=23 // pred_fallthru
          _
        // Predicated region
        $region33: #{tpu_custom_call.1} parent=23 // pred_check
          %p112 = pneg %p48
        $region34: #{tpu_custom_call.1} parent=23 // pred_check_branch
          %114 = sbr.rel (%p112) target = $region36
        $region35: #{tpu_custom_call.1} parent=23 // pred_region
          %116 = dma.done [#allocation4], 128
        $region36: #{tpu_custom_call.1} parent=23 // pred_fallthru
          _
      $region24: #{tpu_custom_call.1} parent=5 // pred_fallthru
        _
      %p117 = scmp.le.s32.totalorder 2, %s9
      // Predicated region
      $region37: #{tpu_custom_call.1} parent=5 // pred_check
        %p118 = pneg %p117
      $region38: #{tpu_custom_call.1} parent=5 // pred_check_branch
        %120 = sbr.rel (%p118) target = $region40
      $region39: #{tpu_custom_call.1} parent=5 // pred_region
        %s121 = ssub.s32 %s9, 2
      $region40: #{tpu_custom_call.1} parent=5 // pred_fallthru
        _
    $region6: #{tpu_custom_call.1} parent=1 // loop_footer
      %s13 = sadd.s32 1, %s9
    $region7: #{tpu_custom_call.1} parent=1 // loop_footer_branch
      %8 = sbr.rel target = $region3
    $region8: #{tpu_custom_call.1} parent=1 // loop_exit
      _
    %122 = vsyncpa [#allocation3], 1
    %s123 = scalar_lea.sflag [#allocation3], 1
    %124 = vsyncpa %s123, 1
    %125 = vsyncpa [#allocation4], 1
    %s126 = scalar_lea.sflag [#allocation4], 1
    %127 = vsyncpa %s126, 1

// kernel: tpu_custom_call.1
$region0: #{tpu_custom_call.1}
  #allocation0 [shape = 'u32[]', space=smem, size = 0x4, offset = 0x4, fixed_abs, tag = 'smem constant byte address 0x4 - core index']
  #allocation1 [shape = 'u32[72,128]{1,0:T(1,128)}', space=vmem, size = 0x9000, scoped, tag = 'internal scratch']
  %s0 = inlined_call_operand.hbm [shape: bf16[512,256], index: 0, kind: input, shape index: {}]
  %s1 = inlined_call_operand.hbm [shape: bf16[256,512], index: 1, kind: input, shape index: {}]
  %s2 = inlined_call_operand.hbm [shape: f32[1,512], index: 2, kind: input, shape index: {}]
  %s3 = inlined_call_operand.hbm [shape: bf16[512,256], index: 3, kind: input, shape index: {}]
  %s4 = inlined_call_operand.vmem [shape: f32[1,256], index: 4, kind: input, shape index: {}]
  %s5 = inlined_call_operand.hbm [shape: bf16[512,256], index: 5, kind: output, shape index: {}]
  %s6 = sld [smem:[#allocation0]]
  $region69: #{tpu_custom_call.1} parent=0
    _
  %s8 = ssub.s32 1, %s6
  %s9 = scalar_select 0, %s8, %s6
  $region1: #{tpu_custom_call.1} parent=0
    #allocation2 [shape = 'u8[131072]{0}', space=vmem, size = 0x20000, scoped, tag = 'input window, operand 0']
    #allocation3 [shape = 's32[2]{0}', space=sflag, size = 0x8, scoped, tag = 'scoped memory for tpu_custom_call.1']
    #allocation4 [shape = 's32[2]{0}', space=sflag, size = 0x8, scoped, tag = 'scoped memory for tpu_custom_call.1']
    #allocation5 [shape = 'u8[262144]{0}', space=vmem, size = 0x40000, scoped, tag = 'input window, operand 1, single buffered']
    #allocation6 [shape = 's32[1]{0}', space=sflag, size = 0x4, scoped, tag = 'scoped memory for tpu_custom_call.1']
    #allocation7 [shape = 'u8[2048]{0}', space=vmem, size = 0x800, scoped, tag = 'input window, operand 2, single buffered']
    #allocation8 [shape = 'u8[262144]{0}', space=vmem, size = 0x40000, scoped, tag = 'input window, operand 3, single buffered']
    #allocation9 [shape = 's32[1]{0}', space=sflag, size = 0x4, scoped, tag = 'scoped memory for tpu_custom_call.1']
    #allocation10 [shape = 'u8[131072]{0}', space=vmem, size = 0x20000, scoped, tag = 'output window, operand 0']
    %10 = vsyncpa [#allocation3], 0
    %s11 = scalar_lea.sflag [#allocation3], 1
    %12 = vsyncpa %s11, 0
    %13 = vsyncpa [#allocation6], 0
    %14 = vsyncpa [#allocation9], 0
    %15 = vsyncpa [#allocation4], 0
    %s16 = scalar_lea.sflag [#allocation4], 1
    %17 = vsyncpa %s16, 0
    loop: start=0, step=1, limit=6
    $region2: #{tpu_custom_call.1} parent=1 // loop_pre_header
      _
    $region3: #{tpu_custom_call.1} parent=1 // loop_header
      %s19 = sphi 0, %s23
      %p20 = scmp.ge.s32.totalorder %s19, 6
      %s29 = sphi 0, %s31
      %s32 = sphi 0, %s29
      %s33 = sphi 0, %s32
      %s49 = sphi 0, %s33
      %s53 = sphi 0, %s53
      %s55 = sphi 0, %s53
      %s56 = sphi 0, %s55
      %s70 = sphi 0, %s56
      %s74 = sphi 0, %s74
      %s76 = sphi 0, %s74
      %s77 = sphi 0, %s76
      %s91 = sphi 0, %s77
      %s95 = sphi 0, %s95
      %s97 = sphi 0, %s95
      %s98 = sphi 0, %s97
      %s112 = sphi 0, %s98
      %s116 = sphi 0, %s116
      %s118 = sphi 0, %s116
      %s119 = sphi 0, %s118
      %s133 = sphi 0, %s119
      %s139 = sphi 0, %s141
      %s142 = sphi 0, %s139
      %s143 = sphi 0, %s142
      %s159 = sphi 0, %s143
    $region4: #{tpu_custom_call.1} parent=1 // loop_header_branch
      %22 = sbr.rel (%p20) target = $region8
    $region5: #{tpu_custom_call.1} parent=1 // loop_body
      %s24 = ssub.s32 %s19, 1
      %s25 = ssub.s32 %s19, 2
      %s26 = sadd.s32 %s19, 1
      %s27 = ssub.s32 %s19, %s26
      %p28 = scmp.eq.s32.totalorder %s27, 0
      %s30 = sadd.s32 %s29, 1
      %s31 = scalar_select %p28, %s29, %s30
      %p34 = pneg %p28
      %p35 = scmp.eq.s32.totalorder %s19, 3
      %p36 = por %p34, %p35
      %p37 = scmp.ne.s32.totalorder %s29, %s32
      %p38 = scmp.eq.s32.totalorder %s19, 0
      %p39 = por %p37, %p38
      %p40 = scmp.ne.s32.totalorder %s29, %s32
      %p41 = scmp.eq.s32.totalorder %s24, 3
      %p42 = por %p40, %p41
      %p43 = scmp.ne.s32.totalorder %s32, %s33
      %p44 = scmp.eq.s32.totalorder %s24, 0
      %p45 = por %p43, %p44
      %p46 = scmp.ne.s32.totalorder %s32, %s33
      %p47 = scmp.eq.s32.totalorder %s25, 3
      %p48 = por %p46, %p47
      %p50 = scmp.ne.s32.totalorder %s33, %s49
      %p51 = scmp.eq.s32.totalorder %s25, 0
      %p52 = por %p50, %p51
      %s54 = sadd.s32 %s53, 1
      %p57 = scmp.eq.s32.totalorder %s19, 3
      %p58 = scmp.ne.s32.totalorder %s53, %s55
      %p59 = scmp.eq.s32.totalorder %s19, 0
      %p60 = por %p58, %p59
      %p61 = scmp.ne.s32.totalorder %s53, %s55
      %p62 = scmp.eq.s32.totalorder %s24, 3
      %p63 = por %p61, %p62
      %p64 = scmp.ne.s32.totalorder %s55, %s56
      %p65 = scmp.eq.s32.totalorder %s24, 0
      %p66 = por %p64, %p65
      %p67 = scmp.ne.s32.totalorder %s55, %s56
      %p68 = scmp.eq.s32.totalorder %s25, 3
      %p69 = por %p67, %p68
      %p71 = scmp.ne.s32.totalorder %s56, %s70
      %p72 = scmp.eq.s32.totalorder %s25, 0
      %p73 = por %p71, %p72
      %s75 = sadd.s32 %s74, 1
      %p78 = scmp.eq.s32.totalorder %s19, 3
      %p79 = scmp.ne.s32.totalorder %s74, %s76
      %p80 = scmp.eq.s32.totalorder %s19, 0
      %p81 = por %p79, %p80
      %p82 = scmp.ne.s32.totalorder %s74, %s76
      %p83 = scmp.eq.s32.totalorder %s24, 3
      %p84 = por %p82, %p83
      %p85 = scmp.ne.s32.totalorder %s76, %s77
      %p86 = scmp.eq.s32.totalorder %s24, 0
      %p87 = por %p85, %p86
      %p88 = scmp.ne.s32.totalorder %s76, %s77
      %p89 = scmp.eq.s32.totalorder %s25, 3
      %p90 = por %p88, %p89
      %p92 = scmp.ne.s32.totalorder %s77, %s91
      %p93 = scmp.eq.s32.totalorder %s25, 0
      %p94 = por %p92, %p93
      %s96 = sadd.s32 %s95, 1
      %p99 = scmp.eq.s32.totalorder %s19, 3
      %p100 = scmp.ne.s32.totalorder %s95, %s97
      %p101 = scmp.eq.s32.totalorder %s19, 0
      %p102 = por %p100, %p101
      %p103 = scmp.ne.s32.totalorder %s95, %s97
      %p104 = scmp.eq.s32.totalorder %s24, 3
      %p105 = por %p103, %p104
      %p106 = scmp.ne.s32.totalorder %s97, %s98
      %p107 = scmp.eq.s32.totalorder %s24, 0
      %p108 = por %p106, %p107
      %p109 = scmp.ne.s32.totalorder %s97, %s98
      %p110 = scmp.eq.s32.totalorder %s25, 3
      %p111 = por %p109, %p110
      %p113 = scmp.ne.s32.totalorder %s98, %s112
      %p114 = scmp.eq.s32.totalorder %s25, 0
      %p115 = por %p113, %p114
      %s117 = sadd.s32 %s116, 1
      %p120 = scmp.eq.s32.totalorder %s19, 3
      %p121 = scmp.ne.s32.totalorder %s116, %s118
      %p122 = scmp.eq.s32.totalorder %s19, 0
      %p123 = por %p121, %p122
      %p124 = scmp.ne.s32.totalorder %s116, %s118
      %p125 = scmp.eq.s32.totalorder %s24, 3
      %p126 = por %p124, %p125
      %p127 = scmp.ne.s32.totalorder %s118, %s119
      %p128 = scmp.eq.s32.totalorder %s24, 0
      %p129 = por %p127, %p128
      %p130 = scmp.ne.s32.totalorder %s118, %s119
      %p131 = scmp.eq.s32.totalorder %s25, 3
      %p132 = por %p130, %p131
      %p134 = scmp.ne.s32.totalorder %s119, %s133
      %p135 = scmp.eq.s32.totalorder %s25, 0
      %p136 = por %p134, %p135
      %s137 = ssub.s32 %s19, %s26
      %p138 = scmp.eq.s32.totalorder %s137, 0
      %s140 = sadd.s32 %s139, 1
      %s141 = scalar_select %p138, %s139, %s140
      %p144 = pneg %p138
      %p145 = scmp.eq.s32.totalorder %s19, 3
      %p146 = por %p144, %p145
      %p147 = scmp.ne.s32.totalorder %s139, %s142
      %p148 = scmp.eq.s32.totalorder %s19, 0
      %p149 = por %p147, %p148
      %p150 = scmp.ne.s32.totalorder %s139, %s142
      %p151 = scmp.eq.s32.totalorder %s24, 3
      %p152 = por %p150, %p151
      %p153 = scmp.ne.s32.totalorder %s142, %s143
      %p154 = scmp.eq.s32.totalorder %s24, 0
      %p155 = por %p153, %p154
      %p156 = scmp.ne.s32.totalorder %s142, %s143
      %p157 = scmp.eq.s32.totalorder %s25, 3
      %p158 = por %p156, %p157
      %p160 = scmp.ne.s32.totalorder %s143, %s159
      %p161 = scmp.eq.s32.totalorder %s25, 0
      %p162 = por %p160, %p161
      %p163 = scmp.le.s32.totalorder 1, %s19
      %p164 = scmp.lt.s32.totalorder %s19, 5
      %p165 = pnand %p163, %p164
      %p166 = pneg %p165
      // Predicated region
      $region9: #{tpu_custom_call.1} parent=5 // pred_check
        _
      $region10: #{tpu_custom_call.1} parent=5 // pred_check_branch
        %168 = sbr.rel (%p165) target = $region12
      $region11: #{tpu_custom_call.1} parent=5 // pred_region
        %s169 = ssub.s32 %s19, 1
        // Predicated region
        $region13: #{tpu_custom_call.1} parent=11 // pred_check
          %p170 = pneg %p66
        $region14: #{tpu_custom_call.1} parent=11 // pred_check_branch
          %172 = sbr.rel (%p170) target = $region16
        $region15: #{tpu_custom_call.1} parent=11 // pred_region
          %174 = vsyncadd [#allocation6], 0
          %s175 = sshll.u32 %s1, 4
          %s176 = int_to_ptr.hbm [resolvable:$true] %s175
          %s177 = sshll.u32 [#allocation5], 4
          %s178 = int_to_ptr.vmem [resolvable:$true] %s177
          %183 = dma.hbm_to_vmem [thread:$0]  %s176, 8192, %s178, [#allocation6], 256, 256, 16
        $region16: #{tpu_custom_call.1} parent=11 // pred_fallthru
          _
        // Predicated region
        $region17: #{tpu_custom_call.1} parent=11 // pred_check
          %p184 = pneg %p87
        $region18: #{tpu_custom_call.1} parent=11 // pred_check_branch
          %186 = sbr.rel (%p184) target = $region20
        $region19: #{tpu_custom_call.1} parent=11 // pred_region
          %188 = vsyncadd [#allocation6], 0
          %s190 = sshll.u32 %s2, 4
          %s191 = int_to_ptr.hbm [resolvable:$true] %s190
          %s192 = sshll.u32 [#allocation7], 4
          %s193 = int_to_ptr.vmem [resolvable:$true] %s192
          %195 = dma.hbm_to_vmem [thread:$0]  %s191, 64, %s193, [#allocation6]
        $region20: #{tpu_custom_call.1} parent=11 // pred_fallthru
          _
        // Predicated region
        $region21: #{tpu_custom_call.1} parent=11 // pred_check
          %p196 = pneg %p108
        $region22: #{tpu_custom_call.1} parent=11 // pred_check_branch
          %198 = sbr.rel (%p196) target = $region24
        $region23: #{tpu_custom_call.1} parent=11 // pred_region
          %200 = vsyncadd [#allocation9], 0
          %s201 = sshll.u32 %s3, 4
          %s202 = int_to_ptr.hbm [resolvable:$true] %s201
          %s203 = sshll.u32 [#allocation8], 4
          %s204 = int_to_ptr.vmem [resolvable:$true] %s203
          %209 = dma.hbm_to_vmem [thread:$0]  %s202, 8192, %s204, [#allocation9], 128, 128, 8
        $region24: #{tpu_custom_call.1} parent=11 // pred_fallthru
          _
        // Predicated region
        $region25: #{tpu_custom_call.1} parent=11 // pred_check
          %p210 = pneg %p129
        $region26: #{tpu_custom_call.1} parent=11 // pred_check_branch
          %212 = sbr.rel (%p210) target = $region28
        $region27: #{tpu_custom_call.1} parent=11 // pred_region
          _
        $region28: #{tpu_custom_call.1} parent=11 // pred_fallthru
          _
      $region12: #{tpu_custom_call.1} parent=5 // pred_fallthru
        _
      %p213 = scmp.lt.s32.totalorder %s19, 4
      // Predicated region
      $region29: #{tpu_custom_call.1} parent=5 // pred_check
        %p214 = pneg %p213
      $region30: #{tpu_custom_call.1} parent=5 // pred_check_branch
        %216 = sbr.rel (%p214) target = $region32
      $region31: #{tpu_custom_call.1} parent=5 // pred_region
        // Predicated region
        $region33: #{tpu_custom_call.1} parent=31 // pred_check
          %p217 = pneg %p39
        $region34: #{tpu_custom_call.1} parent=31 // pred_check_branch
          %219 = sbr.rel (%p217) target = $region36
        $region35: #{tpu_custom_call.1} parent=31 // pred_region
          %s220 = sand.u32 %s29, 1
          %s221 = scalar_lea.sflag [#allocation3], %s220
          %s222 = sand.u32 %s29, 1
          %s223 = smul.addr %s222, 128
          %s224 = scalar_lea.vmem [#allocation2], %s223
          %s225 = smul.u32 16, %s19
          %227 = vsyncadd %s221, 0
          %s228 = smul.addr %s225, 2
          %s229 = smul.addr %s228, 4
          %s230 = scalar_lea.hbm %s0, %s229
          %s231 = sshll.u32 %s230, 4
          %s232 = int_to_ptr.hbm [resolvable:$true] %s231
          %s233 = sshll.u32 %s224, 4
          %s234 = int_to_ptr.vmem [resolvable:$true] %s233
          %239 = dma.hbm_to_vmem [thread:$0]  %s232, 2048, %s234, %s221, 128, 128, 8
        $region36: #{tpu_custom_call.1} parent=31 // pred_fallthru
          _
      $region32: #{tpu_custom_call.1} parent=5 // pred_fallthru
        _
      %p240 = scmp.le.s32.totalorder 1, %s19
      %p241 = scmp.lt.s32.totalorder %s19, 5
      %p242 = pnand %p240, %p241
      %p243 = pneg %p242
      // Predicated region
      $region37: #{tpu_custom_call.1} parent=5 // pred_check
        _
      $region38: #{tpu_custom_call.1} parent=5 // pred_check_branch
        %245 = sbr.rel (%p242) target = $region40
      $region39: #{tpu_custom_call.1} parent=5 // pred_region
        %s246 = ssub.s32 %s19, 1
        %s247 = sand.u32 %s32, 1
        %s248 = scalar_lea.sflag [#allocation3], %s247
        %s249 = sand.u32 %s32, 1
        %s250 = smul.addr %s249, 128
        %s251 = scalar_lea.vmem [#allocation2], %s250
        // Predicated region
        $region41: #{tpu_custom_call.1} parent=39 // pred_check
          %p252 = pneg %p45
        $region42: #{tpu_custom_call.1} parent=39 // pred_check_branch
          %254 = sbr.rel (%p252) target = $region44
        $region43: #{tpu_custom_call.1} parent=39 // pred_region
          %256 = dma.done %s248, 2048
        $region44: #{tpu_custom_call.1} parent=39 // pred_fallthru
          _
        // Predicated region
        $region45: #{tpu_custom_call.1} parent=39 // pred_check
          %p257 = pneg %p66
        $region46: #{tpu_custom_call.1} parent=39 // pred_check_branch
          %259 = sbr.rel (%p257) target = $region48
        $region47: #{tpu_custom_call.1} parent=39 // pred_region
          %261 = dma.done [#allocation6], 8192
        $region48: #{tpu_custom_call.1} parent=39 // pred_fallthru
          _
        // Predicated region
        $region49: #{tpu_custom_call.1} parent=39 // pred_check
          %p262 = pneg %p87
        $region50: #{tpu_custom_call.1} parent=39 // pred_check_branch
          %264 = sbr.rel (%p262) target = $region52
        $region51: #{tpu_custom_call.1} parent=39 // pred_region
          %266 = dma.done [#allocation6], 64
        $region52: #{tpu_custom_call.1} parent=39 // pred_fallthru
          _
        // Predicated region
        $region53: #{tpu_custom_call.1} parent=39 // pred_check
          %p267 = pneg %p108
        $region54: #{tpu_custom_call.1} parent=39 // pred_check_branch
          %269 = sbr.rel (%p267) target = $region56
        $region55: #{tpu_custom_call.1} parent=39 // pred_region
          %271 = dma.done [#allocation9], 8192
        $region56: #{tpu_custom_call.1} parent=39 // pred_fallthru
          _
        %s272 = sand.u32 %s32, 1
        %s273 = scalar_lea.sflag [#allocation3], %s272
        %s274 = sand.u32 %s32, 1
        %s275 = smul.addr %s274, 128
        %s276 = scalar_lea.vmem [#allocation2], %s275
        %p277 = pneg %p45
        %p278 = pneg %p42
        %p279 = pneg %p66
        %p280 = pneg %p63
        %p281 = pneg %p87
        %p282 = pneg %p84
        %p283 = pneg %p108
        %p284 = pneg %p105
        %p285 = pneg %p129
        %p286 = pneg %p126
        %p287 = pneg %p155
        %p288 = pneg %p152
        %s289 = sand.u32 %s142, 1
        %s290 = scalar_lea.sflag [#allocation4], %s289
        %s291 = sand.u32 %s142, 1
        %s292 = smul.addr %s291, 128
        %s293 = scalar_lea.vmem [#allocation10], %s292
        %s294 = smul.u32 16, %s24
        %s295 = smul.u32 16, %s24
        %v296 = vld [vmem:[%s251] sm:$0xff]
        %v297 = vld [vmem:[%s251 + $0x8] sm:$0xff]
        %v298 = vld [vmem:[%s251 + $0x10] sm:$0xff]
        %v299 = vld [vmem:[%s251 + $0x18] sm:$0xff]
        %v300 = vld [vmem:[%s251 + $0x20] sm:$0xff]
        %v301 = vld [vmem:[%s251 + $0x28] sm:$0xff]
        %v302 = vld [vmem:[%s251 + $0x30] sm:$0xff]
        %v303 = vld [vmem:[%s251 + $0x38] sm:$0xff]
        %v304 = vld [vmem:[%s251 + $0x40] sm:$0xff]
        %v305 = vld [vmem:[%s251 + $0x48] sm:$0xff]
        %v306 = vld [vmem:[%s251 + $0x50] sm:$0xff]
        %v307 = vld [vmem:[%s251 + $0x58] sm:$0xff]
        %v308 = vld [vmem:[%s251 + $0x60] sm:$0xff]
        %v309 = vld [vmem:[%s251 + $0x68] sm:$0xff]
        %v310 = vld [vmem:[%s251 + $0x70] sm:$0xff]
        %v311 = vld [vmem:[%s251 + $0x78] sm:$0xff]
        %v312 = vld [vmem:[#allocation5] sm:$0xff]
        %v313 = vld [vmem:[#allocation5 + $0x8] sm:$0xff]
        %v314 = vld [vmem:[#allocation5 + $0x10] sm:$0xff]
        %v315 = vld [vmem:[#allocation5 + $0x18] sm:$0xff]
        %v316 = vld [vmem:[#allocation5 + $0x20] sm:$0xff]
        %v317 = vld [vmem:[#allocation5 + $0x28] sm:$0xff]
        %v318 = vld [vmem:[#allocation5 + $0x30] sm:$0xff]
        %v319 = vld [vmem:[#allocation5 + $0x38] sm:$0xff]
        %v320 = vld [vmem:[#allocation5 + $0x40] sm:$0xff]
        %v321 = vld [vmem:[#allocation5 + $0x48] sm:$0xff]
        %v322 = vld [vmem:[#allocation5 + $0x50] sm:$0xff]
        %v323 = vld [vmem:[#allocation5 + $0x58] sm:$0xff]
        %v324 = vld [vmem:[#allocation5 + $0x60] sm:$0xff]
        %v325 = vld [vmem:[#allocation5 + $0x68] sm:$0xff]
        %v326 = vld [vmem:[#allocation5 + $0x70] sm:$0xff]
        %v327 = vld [vmem:[#allocation5 + $0x78] sm:$0xff]
        %v328 = vld [vmem:[#allocation5 + $0x80] sm:$0xff]
        %v329 = vld [vmem:[#allocation5 + $0x88] sm:$0xff]
        %v330 = vld [vmem:[#allocation5 + $0x90] sm:$0xff]
        %v331 = vld [vmem:[#allocation5 + $0x98] sm:$0xff]
        %v332 = vld [vmem:[#allocation5 + $0xa0] sm:$0xff]
        %v333 = vld [vmem:[#allocation5 + $0xa8] sm:$0xff]
        %v334 = vld [vmem:[#allocation5 + $0xb0] sm:$0xff]
        %v335 = vld [vmem:[#allocation5 + $0xb8] sm:$0xff]
        %v336 = vld [vmem:[#allocation5 + $0xc0] sm:$0xff]
        %v337 = vld [vmem:[#allocation5 + $0xc8] sm:$0xff]
        %v338 = vld [vmem:[#allocation5 + $0xd0] sm:$0xff]
        %v339 = vld [vmem:[#allocation5 + $0xd8] sm:$0xff]
        %v340 = vld [vmem:[#allocation5 + $0xe0] sm:$0xff]
        %v341 = vld [vmem:[#allocation5 + $0xe8] sm:$0xff]
        %v342 = vld [vmem:[#allocation5 + $0xf0] sm:$0xff]
        %v343 = vld [vmem:[#allocation5 + $0xf8] sm:$0xff]
        %v344 = vld [vmem:[#allocation5 + $0x100] sm:$0xff]
        %v345 = vld [vmem:[#allocation5 + $0x108] sm:$0xff]
        %v346 = vld [vmem:[#allocation5 + $0x110] sm:$0xff]
        %v347 = vld [vmem:[#allocation5 + $0x118] sm:$0xff]
        %v348 = vld [vmem:[#allocation5 + $0x120] sm:$0xff]
        %v349 = vld [vmem:[#allocation5 + $0x128] sm:$0xff]
        %v350 = vld [vmem:[#allocation5 + $0x130] sm:$0xff]
        %v351 = vld [vmem:[#allocation5 + $0x138] sm:$0xff]
        %v352 = vld [vmem:[#allocation5 + $0x140] sm:$0xff]
        %v353 = vld [vmem:[#allocation5 + $0x148] sm:$0xff]
        %v354 = vld [vmem:[#allocation5 + $0x150] sm:$0xff]
        %v355 = vld [vmem:[#allocation5 + $0x158] sm:$0xff]
        %v356 = vld [vmem:[#allocation5 + $0x160] sm:$0xff]
        %v357 = vld [vmem:[#allocation5 + $0x168] sm:$0xff]
        %v358 = vld [vmem:[#allocation5 + $0x170] sm:$0xff]
        %v359 = vld [vmem:[#allocation5 + $0x178] sm:$0xff]
        %v360 = vld [vmem:[#allocation5 + $0x180] sm:$0xff]
        %v361 = vld [vmem:[#allocation5 + $0x188] sm:$0xff]
        %v362 = vld [vmem:[#allocation5 + $0x190] sm:$0xff]
        %v363 = vld [vmem:[#allocation5 + $0x198] sm:$0xff]
        %v364 = vld [vmem:[#allocation5 + $0x1a0] sm:$0xff]
        %v365 = vld [vmem:[#allocation5 + $0x1a8] sm:$0xff]
        %v366 = vld [vmem:[#allocation5 + $0x1b0] sm:$0xff]
        %v367 = vld [vmem:[#allocation5 + $0x1b8] sm:$0xff]
        %v368 = vld [vmem:[#allocation5 + $0x1c0] sm:$0xff]
        %v369 = vld [vmem:[#allocation5 + $0x1c8] sm:$0xff]
        %v370 = vld [vmem:[#allocation5 + $0x1d0] sm:$0xff]
        %v371 = vld [vmem:[#allocation5 + $0x1d8] sm:$0xff]
        %v372 = vld [vmem:[#allocation5 + $0x1e0] sm:$0xff]
        %v373 = vld [vmem:[#allocation5 + $0x1e8] sm:$0xff]
        %v374 = vld [vmem:[#allocation5 + $0x1f0] sm:$0xff]
        %v375 = vld [vmem:[#allocation5 + $0x1f8] sm:$0xff]
        %v376 = vld [vmem:[#allocation7] sm:$0xf]
        %v378 = vperm.slane %v376, 0
        %v379 = vperm.slane %v376, 1
        %v380 = vperm.slane %v376, 2
        %v381 = vperm.slane %v376, 3
        %v402 = vunpack.c.l.b16 %v296
        %v403 = vunpack.c.h.b16 %v296
        %v404 = vunpack.c.l.b16 %v297
        %v405 = vunpack.c.h.b16 %v297
        %v406 = vunpack.c.l.b16 %v298
        %v407 = vunpack.c.h.b16 %v298
        %v408 = vunpack.c.l.b16 %v299
        %v409 = vunpack.c.h.b16 %v299
        %v410 = vunpack.c.l.b16 %v300
        %v411 = vunpack.c.h.b16 %v300
        %v412 = vunpack.c.l.b16 %v301
        %v413 = vunpack.c.h.b16 %v301
        %v414 = vunpack.c.l.b16 %v302
        %v415 = vunpack.c.h.b16 %v302
        %v416 = vunpack.c.l.b16 %v303
        %v417 = vunpack.c.h.b16 %v303
        %v418 = vunpack.c.l.b16 %v304
        %v419 = vunpack.c.h.b16 %v304
        %v420 = vunpack.c.l.b16 %v305
        %v421 = vunpack.c.h.b16 %v305
        %v422 = vunpack.c.l.b16 %v306
        %v423 = vunpack.c.h.b16 %v306
        %v424 = vunpack.c.l.b16 %v307
        %v425 = vunpack.c.h.b16 %v307
        %v426 = vunpack.c.l.b16 %v308
        %v427 = vunpack.c.h.b16 %v308
        %v428 = vunpack.c.l.b16 %v309
        %v429 = vunpack.c.h.b16 %v309
        %v430 = vunpack.c.l.b16 %v310
        %v431 = vunpack.c.h.b16 %v310
        %v432 = vunpack.c.l.b16 %v311
        %v433 = vunpack.c.h.b16 %v311
        %v434 = vpack.c.b16 %v404, %v402
        %v435 = vpack.c.b16 %v405, %v403
        %v436 = vpack.c.b16 %v408, %v406
        %v437 = vpack.c.b16 %v409, %v407
        %v438 = vpack.c.b16 %v412, %v410
        %v439 = vpack.c.b16 %v413, %v411
        %v440 = vpack.c.b16 %v416, %v414
        %v441 = vpack.c.b16 %v417, %v415
        %v442 = vpack.c.b16 %v420, %v418
        %v443 = vpack.c.b16 %v421, %v419
        %v444 = vpack.c.b16 %v424, %v422
        %v445 = vpack.c.b16 %v425, %v423
        %v446 = vpack.c.b16 %v428, %v426
        %v447 = vpack.c.b16 %v429, %v427
        %v448 = vpack.c.b16 %v432, %v430
        %v449 = vpack.c.b16 %v433, %v431
        %v530 = vunpack.c.l.b16 %v312
        %v531 = vunpack.c.h.b16 %v312
        %v532 = vunpack.c.l.b16 %v313
        %v533 = vunpack.c.h.b16 %v313
        %v534 = vunpack.c.l.b16 %v314
        %v535 = vunpack.c.h.b16 %v314
        %v536 = vunpack.c.l.b16 %v315
        %v537 = vunpack.c.h.b16 %v315
        %v538 = vunpack.c.l.b16 %v316
        %v539 = vunpack.c.h.b16 %v316
        %v540 = vunpack.c.l.b16 %v317
        %v541 = vunpack.c.h.b16 %v317
        %v542 = vunpack.c.l.b16 %v318
        %v543 = vunpack.c.h.b16 %v318
        %v544 = vunpack.c.l.b16 %v319
        %v545 = vunpack.c.h.b16 %v319
        %v546 = vunpack.c.l.b16 %v320
        %v547 = vunpack.c.h.b16 %v320
        %v548 = vunpack.c.l.b16 %v321
        %v549 = vunpack.c.h.b16 %v321
        %v550 = vunpack.c.l.b16 %v322
        %v551 = vunpack.c.h.b16 %v322
        %v552 = vunpack.c.l.b16 %v323
        %v553 = vunpack.c.h.b16 %v323
        %v554 = vunpack.c.l.b16 %v324
        %v555 = vunpack.c.h.b16 %v324
        %v556 = vunpack.c.l.b16 %v325
        %v557 = vunpack.c.h.b16 %v325
        %v558 = vunpack.c.l.b16 %v326
        %v559 = vunpack.c.h.b16 %v326
        %v560 = vunpack.c.l.b16 %v327
        %v561 = vunpack.c.h.b16 %v327
        %v562 = vunpack.c.l.b16 %v328
        %v563 = vunpack.c.h.b16 %v328
        %v564 = vunpack.c.l.b16 %v329
        %v565 = vunpack.c.h.b16 %v329
        %v566 = vunpack.c.l.b16 %v330
        %v567 = vunpack.c.h.b16 %v330
        %v568 = vunpack.c.l.b16 %v331
        %v569 = vunpack.c.h.b16 %v331
        %v570 = vunpack.c.l.b16 %v332
        %v571 = vunpack.c.h.b16 %v332
        %v572 = vunpack.c.l.b16 %v333
        %v573 = vunpack.c.h.b16 %v333
        %v574 = vunpack.c.l.b16 %v334
        %v575 = vunpack.c.h.b16 %v334
        %v576 = vunpack.c.l.b16 %v335
        %v577 = vunpack.c.h.b16 %v335
        %v578 = vunpack.c.l.b16 %v336
        %v579 = vunpack.c.h.b16 %v336
        %v580 = vunpack.c.l.b16 %v337
        %v581 = vunpack.c.h.b16 %v337
        %v582 = vunpack.c.l.b16 %v338
        %v583 = vunpack.c.h.b16 %v338
        %v584 = vunpack.c.l.b16 %v339
        %v585 = vunpack.c.h.b16 %v339
        %v586 = vunpack.c.l.b16 %v340
        %v587 = vunpack.c.h.b16 %v340
        %v588 = vunpack.c.l.b16 %v341
        %v589 = vunpack.c.h.b16 %v341
        %v590 = vunpack.c.l.b16 %v342
        %v591 = vunpack.c.h.b16 %v342
        %v592 = vunpack.c.l.b16 %v343
        %v593 = vunpack.c.h.b16 %v343
        %v594 = vunpack.c.l.b16 %v344
        %v595 = vunpack.c.h.b16 %v344
        %v596 = vunpack.c.l.b16 %v345
        %v597 = vunpack.c.h.b16 %v345
        %v598 = vunpack.c.l.b16 %v346
        %v599 = vunpack.c.h.b16 %v346
        %v600 = vunpack.c.l.b16 %v347
        %v601 = vunpack.c.h.b16 %v347
        %v602 = vunpack.c.l.b16 %v348
        %v603 = vunpack.c.h.b16 %v348
        %v604 = vunpack.c.l.b16 %v349
        %v605 = vunpack.c.h.b16 %v349
        %v606 = vunpack.c.l.b16 %v350
        %v607 = vunpack.c.h.b16 %v350
        %v608 = vunpack.c.l.b16 %v351
        %v609 = vunpack.c.h.b16 %v351
        %v610 = vunpack.c.l.b16 %v352
        %v611 = vunpack.c.h.b16 %v352
        %v612 = vunpack.c.l.b16 %v353
        %v613 = vunpack.c.h.b16 %v353
        %v614 = vunpack.c.l.b16 %v354
        %v615 = vunpack.c.h.b16 %v354
        %v616 = vunpack.c.l.b16 %v355
        %v617 = vunpack.c.h.b16 %v355
        %v618 = vunpack.c.l.b16 %v356
        %v619 = vunpack.c.h.b16 %v356
        %v620 = vunpack.c.l.b16 %v357
        %v621 = vunpack.c.h.b16 %v357
        %v622 = vunpack.c.l.b16 %v358
        %v623 = vunpack.c.h.b16 %v358
        %v624 = vunpack.c.l.b16 %v359
        %v625 = vunpack.c.h.b16 %v359
        %v626 = vunpack.c.l.b16 %v360
        %v627 = vunpack.c.h.b16 %v360
        %v628 = vunpack.c.l.b16 %v361
        %v629 = vunpack.c.h.b16 %v361
        %v630 = vunpack.c.l.b16 %v362
        %v631 = vunpack.c.h.b16 %v362
        %v632 = vunpack.c.l.b16 %v363
        %v633 = vunpack.c.h.b16 %v363
        %v634 = vunpack.c.l.b16 %v364
        %v635 = vunpack.c.h.b16 %v364
        %v636 = vunpack.c.l.b16 %v365
        %v637 = vunpack.c.h.b16 %v365
        %v638 = vunpack.c.l.b16 %v366
        %v639 = vunpack.c.h.b16 %v366
        %v640 = vunpack.c.l.b16 %v367
        %v641 = vunpack.c.h.b16 %v367
        %v642 = vunpack.c.l.b16 %v368
        %v643 = vunpack.c.h.b16 %v368
        %v644 = vunpack.c.l.b16 %v369
        %v645 = vunpack.c.h.b16 %v369
        %v646 = vunpack.c.l.b16 %v370
        %v647 = vunpack.c.h.b16 %v370
        %v648 = vunpack.c.l.b16 %v371
        %v649 = vunpack.c.h.b16 %v371
        %v650 = vunpack.c.l.b16 %v372
        %v651 = vunpack.c.h.b16 %v372
        %v652 = vunpack.c.l.b16 %v373
        %v653 = vunpack.c.h.b16 %v373
        %v654 = vunpack.c.l.b16 %v374
        %v655 = vunpack.c.h.b16 %v374
        %v656 = vunpack.c.l.b16 %v375
        %v657 = vunpack.c.h.b16 %v375
        %v658 = vpack.c.b16 %v534, %v530
        %v659 = vpack.c.b16 %v535, %v531
        %v660 = vpack.c.b16 %v536, %v532
        %v661 = vpack.c.b16 %v537, %v533
        %v662 = vpack.c.b16 %v542, %v538
        %v663 = vpack.c.b16 %v543, %v539
        %v664 = vpack.c.b16 %v544, %v540
        %v665 = vpack.c.b16 %v545, %v541
        %v666 = vpack.c.b16 %v550, %v546
        %v667 = vpack.c.b16 %v551, %v547
        %v668 = vpack.c.b16 %v552, %v548
        %v669 = vpack.c.b16 %v553, %v549
        %v670 = vpack.c.b16 %v558, %v554
        %v671 = vpack.c.b16 %v559, %v555
        %v672 = vpack.c.b16 %v560, %v556
        %v673 = vpack.c.b16 %v561, %v557
        %v674 = vpack.c.b16 %v566, %v562
        %v675 = vpack.c.b16 %v567, %v563
        %v676 = vpack.c.b16 %v568, %v564
        %v677 = vpack.c.b16 %v569, %v565
        %v678 = vpack.c.b16 %v574, %v570
        %v679 = vpack.c.b16 %v575, %v571
        %v680 = vpack.c.b16 %v576, %v572
        %v681 = vpack.c.b16 %v577, %v573
        %v682 = vpack.c.b16 %v582, %v578
        %v683 = vpack.c.b16 %v583, %v579
        %v684 = vpack.c.b16 %v584, %v580
        %v685 = vpack.c.b16 %v585, %v581
        %v686 = vpack.c.b16 %v590, %v586
        %v687 = vpack.c.b16 %v591, %v587
        %v688 = vpack.c.b16 %v592, %v588
        %v689 = vpack.c.b16 %v593, %v589
        %v690 = vpack.c.b16 %v598, %v594
        %v691 = vpack.c.b16 %v599, %v595
        %v692 = vpack.c.b16 %v600, %v596
        %v693 = vpack.c.b16 %v601, %v597
        %v694 = vpack.c.b16 %v606, %v602
        %v695 = vpack.c.b16 %v607, %v603
        %v696 = vpack.c.b16 %v608, %v604
        %v697 = vpack.c.b16 %v609, %v605
        %v698 = vpack.c.b16 %v614, %v610
        %v699 = vpack.c.b16 %v615, %v611
        %v700 = vpack.c.b16 %v616, %v612
        %v701 = vpack.c.b16 %v617, %v613
        %v702 = vpack.c.b16 %v622, %v618
        %v703 = vpack.c.b16 %v623, %v619
        %v704 = vpack.c.b16 %v624, %v620
        %v705 = vpack.c.b16 %v625, %v621
        %v706 = vpack.c.b16 %v630, %v626
        %v707 = vpack.c.b16 %v631, %v627
        %v708 = vpack.c.b16 %v632, %v628
        %v709 = vpack.c.b16 %v633, %v629
        %v710 = vpack.c.b16 %v638, %v634
        %v711 = vpack.c.b16 %v639, %v635
        %v712 = vpack.c.b16 %v640, %v636
        %v713 = vpack.c.b16 %v641, %v637
        %v714 = vpack.c.b16 %v646, %v642
        %v715 = vpack.c.b16 %v647, %v643
        %v716 = vpack.c.b16 %v648, %v644
        %v717 = vpack.c.b16 %v649, %v645
        %v718 = vpack.c.b16 %v654, %v650
        %v719 = vpack.c.b16 %v655, %v651
        %v720 = vpack.c.b16 %v656, %v652
        %v721 = vpack.c.b16 %v657, %v653
        %786 = vmatpush.bf16.msra.mxu0 %v686
        %787 = vmatpush.bf16.msra.mxu0 %v682
        %788 = vmatpush.bf16.msra.mxu0 %v678
        %789 = vmatpush.bf16.msra.mxu0 %v674
        %790 = vmatpush.bf16.msra.mxu0 %v670
        %791 = vmatpush.bf16.msra.mxu0 %v666
        %792 = vmatpush.bf16.msra.mxu0 %v662
        %793 = vmatpush.bf16.msra.mxu0 %v658
        %794 = vmatmul.bf16.gmra.mxu0 %v434
        %v795 = vpop.f32.mrf.mxu0
        %v796 = vadd.f32 %v378, %v795
        %v797 = vpop.f32.mrf.mxu0
        %v798 = vadd.f32 %v378, %v797
        %799 = vmatmul.bf16.gmra.mxu0 %v436
        %v800 = vpop.f32.mrf.mxu0
        %v801 = vadd.f32 %v378, %v800
        %v802 = vpop.f32.mrf.mxu0
        %v803 = vadd.f32 %v378, %v802
        %804 = vmatmul.bf16.gmra.mxu0 %v438
        %v805 = vpop.f32.mrf.mxu0
        %v806 = vadd.f32 %v378, %v805
        %v807 = vpop.f32.mrf.mxu0
        %v808 = vadd.f32 %v378, %v807
        %809 = vmatmul.bf16.gmra.mxu0 %v440
        %v810 = vpop.f32.mrf.mxu0
        %v811 = vadd.f32 %v378, %v810
        %v812 = vpop.f32.mrf.mxu0
        %v813 = vadd.f32 %v378, %v812
        %814 = vmatmul.bf16.gmra.mxu0 %v442
        %v815 = vpop.f32.mrf.mxu0
        %v816 = vadd.f32 %v378, %v815
        %v817 = vpop.f32.mrf.mxu0
        %v818 = vadd.f32 %v378, %v817
        %819 = vmatmul.bf16.gmra.mxu0 %v444
        %v820 = vpop.f32.mrf.mxu0
        %v821 = vadd.f32 %v378, %v820
        %v822 = vpop.f32.mrf.mxu0
        %v823 = vadd.f32 %v378, %v822
        %824 = vmatmul.bf16.gmra.mxu0 %v446
        %v825 = vpop.f32.mrf.mxu0
        %v826 = vadd.f32 %v378, %v825
        %v827 = vpop.f32.mrf.mxu0
        %v828 = vadd.f32 %v378, %v827
        %829 = vmatmul.bf16.gmra.mxu0 %v448
        %v830 = vpop.f32.mrf.mxu0
        %v831 = vadd.f32 %v378, %v830
        %v832 = vpop.f32.mrf.mxu0
        %v833 = vadd.f32 %v378, %v832
        %834 = vdwg.mxu0
        %835 = vmatpush.bf16.msra.mxu0 %v718
        %836 = vmatpush.bf16.msra.mxu0 %v714
        %837 = vmatpush.bf16.msra.mxu0 %v710
        %838 = vmatpush.bf16.msra.mxu0 %v706
        %839 = vmatpush.bf16.msra.mxu0 %v702
        %840 = vmatpush.bf16.msra.mxu0 %v698
        %841 = vmatpush.bf16.msra.mxu0 %v694
        %842 = vmatpush.bf16.msra.mxu0 %v690
        %843 = vmatmul.bf16.gmra.mxu0 %v435
        %v844 = vpop.f32.mrf.mxu0
        %v845 = vadd.f32 %v796, %v844
        %v846 = vpop.f32.mrf.mxu0
        %v847 = vadd.f32 %v798, %v846
        %848 = vmatmul.bf16.gmra.mxu0 %v437
        %v849 = vpop.f32.mrf.mxu0
        %v850 = vadd.f32 %v801, %v849
        %v851 = vpop.f32.mrf.mxu0
        %v852 = vadd.f32 %v803, %v851
        %853 = vmatmul.bf16.gmra.mxu0 %v439
        %v854 = vpop.f32.mrf.mxu0
        %v855 = vadd.f32 %v806, %v854
        %v856 = vpop.f32.mrf.mxu0
        %v857 = vadd.f32 %v808, %v856
        %858 = vmatmul.bf16.gmra.mxu0 %v441
        %v859 = vpop.f32.mrf.mxu0
        %v860 = vadd.f32 %v811, %v859
        %v861 = vpop.f32.mrf.mxu0
        %v862 = vadd.f32 %v813, %v861
        %863 = vmatmul.bf16.gmra.mxu0 %v443
        %v864 = vpop.f32.mrf.mxu0
        %v865 = vadd.f32 %v816, %v864
        %v866 = vpop.f32.mrf.mxu0
        %v867 = vadd.f32 %v818, %v866
        %868 = vmatmul.bf16.gmra.mxu0 %v445
        %v869 = vpop.f32.mrf.mxu0
        %v870 = vadd.f32 %v821, %v869
        %v871 = vpop.f32.mrf.mxu0
        %v872 = vadd.f32 %v823, %v871
        %873 = vmatmul.bf16.gmra.mxu0 %v447
        %v874 = vpop.f32.mrf.mxu0
        %v875 = vadd.f32 %v826, %v874
        %v876 = vpop.f32.mrf.mxu0
        %v877 = vadd.f32 %v828, %v876
        %878 = vmatmul.bf16.gmra.mxu0 %v449
        %v879 = vpop.f32.mrf.mxu0
        %v880 = vadd.f32 %v831, %v879
        %v881 = vpop.f32.mrf.mxu0
        %v882 = vadd.f32 %v833, %v881
        %883 = vdwg.mxu0
        %884 = vmatpush.bf16.msra.mxu0 %v687
        %885 = vmatpush.bf16.msra.mxu0 %v683
        %886 = vmatpush.bf16.msra.mxu0 %v679
        %887 = vmatpush.bf16.msra.mxu0 %v675
        %888 = vmatpush.bf16.msra.mxu0 %v671
        %889 = vmatpush.bf16.msra.mxu0 %v667
        %890 = vmatpush.bf16.msra.mxu0 %v663
        %891 = vmatpush.bf16.msra.mxu0 %v659
        %892 = vmatmul.bf16.gmra.mxu0 %v434
        %v893 = vpop.f32.mrf.mxu0
        %v894 = vadd.f32 %v379, %v893
        %v895 = vpop.f32.mrf.mxu0
        %v896 = vadd.f32 %v379, %v895
        %897 = vmatmul.bf16.gmra.mxu0 %v436
        %v898 = vpop.f32.mrf.mxu0
        %v899 = vadd.f32 %v379, %v898
        %v900 = vpop.f32.mrf.mxu0
        %v901 = vadd.f32 %v379, %v900
        %902 = vmatmul.bf16.gmra.mxu0 %v438
        %v903 = vpop.f32.mrf.mxu0
        %v904 = vadd.f32 %v379, %v903
        %v905 = vpop.f32.mrf.mxu0
        %v906 = vadd.f32 %v379, %v905
        %907 = vmatmul.bf16.gmra.mxu0 %v440
        %v908 = vpop.f32.mrf.mxu0
        %v909 = vadd.f32 %v379, %v908
        %v910 = vpop.f32.mrf.mxu0
        %v911 = vadd.f32 %v379, %v910
        %912 = vmatmul.bf16.gmra.mxu0 %v442
        %v913 = vpop.f32.mrf.mxu0
        %v914 = vadd.f32 %v379, %v913
        %v915 = vpop.f32.mrf.mxu0
        %v916 = vadd.f32 %v379, %v915
        %917 = vmatmul.bf16.gmra.mxu0 %v444
        %v918 = vpop.f32.mrf.mxu0
        %v919 = vadd.f32 %v379, %v918
        %v920 = vpop.f32.mrf.mxu0
        %v921 = vadd.f32 %v379, %v920
        %922 = vmatmul.bf16.gmra.mxu0 %v446
        %v923 = vpop.f32.mrf.mxu0
        %v924 = vadd.f32 %v379, %v923
        %v925 = vpop.f32.mrf.mxu0
        %v926 = vadd.f32 %v379, %v925
        %927 = vmatmul.bf16.gmra.mxu0 %v448
        %v928 = vpop.f32.mrf.mxu0
        %v929 = vadd.f32 %v379, %v928
        %v930 = vpop.f32.mrf.mxu0
        %v931 = vadd.f32 %v379, %v930
        %932 = vdwg.mxu0
        %933 = vmatpush.bf16.msra.mxu0 %v719
        %934 = vmatpush.bf16.msra.mxu0 %v715
        %935 = vmatpush.bf16.msra.mxu0 %v711
        %936 = vmatpush.bf16.msra.mxu0 %v707
        %937 = vmatpush.bf16.msra.mxu0 %v703
        %938 = vmatpush.bf16.msra.mxu0 %v699
        %939 = vmatpush.bf16.msra.mxu0 %v695
        %940 = vmatpush.bf16.msra.mxu0 %v691
        %941 = vmatmul.bf16.gmra.mxu0 %v435
        %v942 = vpop.f32.mrf.mxu0
        %v943 = vadd.f32 %v894, %v942
        %v944 = vpop.f32.mrf.mxu0
        %v945 = vadd.f32 %v896, %v944
        %946 = vmatmul.bf16.gmra.mxu0 %v437
        %v947 = vpop.f32.mrf.mxu0
        %v948 = vadd.f32 %v899, %v947
        %v949 = vpop.f32.mrf.mxu0
        %v950 = vadd.f32 %v901, %v949
        %951 = vmatmul.bf16.gmra.mxu0 %v439
        %v952 = vpop.f32.mrf.mxu0
        %v953 = vadd.f32 %v904, %v952
        %v954 = vpop.f32.mrf.mxu0
        %v955 = vadd.f32 %v906, %v954
        %956 = vmatmul.bf16.gmra.mxu0 %v441
        %v957 = vpop.f32.mrf.mxu0
        %v958 = vadd.f32 %v909, %v957
        %v959 = vpop.f32.mrf.mxu0
        %v960 = vadd.f32 %v911, %v959
        %961 = vmatmul.bf16.gmra.mxu0 %v443
        %v962 = vpop.f32.mrf.mxu0
        %v963 = vadd.f32 %v914, %v962
        %v964 = vpop.f32.mrf.mxu0
        %v965 = vadd.f32 %v916, %v964
        %966 = vmatmul.bf16.gmra.mxu0 %v445
        %v967 = vpop.f32.mrf.mxu0
        %v968 = vadd.f32 %v919, %v967
        %v969 = vpop.f32.mrf.mxu0
        %v970 = vadd.f32 %v921, %v969
        %971 = vmatmul.bf16.gmra.mxu0 %v447
        %v972 = vpop.f32.mrf.mxu0
        %v973 = vadd.f32 %v924, %v972
        %v974 = vpop.f32.mrf.mxu0
        %v975 = vadd.f32 %v926, %v974
        %976 = vmatmul.bf16.gmra.mxu0 %v449
        %v977 = vpop.f32.mrf.mxu0
        %v978 = vadd.f32 %v929, %v977
        %v979 = vpop.f32.mrf.mxu0
        %v980 = vadd.f32 %v931, %v979
        %981 = vdwg.mxu0
        %982 = vmatpush.bf16.msra.mxu0 %v688
        %983 = vmatpush.bf16.msra.mxu0 %v684
        %984 = vmatpush.bf16.msra.mxu0 %v680
        %985 = vmatpush.bf16.msra.mxu0 %v676
        %986 = vmatpush.bf16.msra.mxu0 %v672
        %987 = vmatpush.bf16.msra.mxu0 %v668
        %988 = vmatpush.bf16.msra.mxu0 %v664
        %989 = vmatpush.bf16.msra.mxu0 %v660
        %990 = vmatmul.bf16.gmra.mxu0 %v434
        %v991 = vpop.f32.mrf.mxu0
        %v992 = vadd.f32 %v380, %v991
        %v993 = vpop.f32.mrf.mxu0
        %v994 = vadd.f32 %v380, %v993
        %995 = vmatmul.bf16.gmra.mxu0 %v436
        %v996 = vpop.f32.mrf.mxu0
        %v997 = vadd.f32 %v380, %v996
        %v998 = vpop.f32.mrf.mxu0
        %v999 = vadd.f32 %v380, %v998
        %1000 = vmatmul.bf16.gmra.mxu0 %v438
        %v1001 = vpop.f32.mrf.mxu0
        %v1002 = vadd.f32 %v380, %v1001
        %v1003 = vpop.f32.mrf.mxu0
        %v1004 = vadd.f32 %v380, %v1003
        %1005 = vmatmul.bf16.gmra.mxu0 %v440
        %v1006 = vpop.f32.mrf.mxu0
        %v1007 = vadd.f32 %v380, %v1006
        %v1008 = vpop.f32.mrf.mxu0
        %v1009 = vadd.f32 %v380, %v1008
        %1010 = vmatmul.bf16.gmra.mxu0 %v442
        %v1011 = vpop.f32.mrf.mxu0
        %v1012 = vadd.f32 %v380, %v1011
        %v1013 = vpop.f32.mrf.mxu0
        %v1014 = vadd.f32 %v380, %v1013
        %1015 = vmatmul.bf16.gmra.mxu0 %v444
        %v1016 = vpop.f32.mrf.mxu0
        %v1017 = vadd.f32 %v380, %v1016
        %v1018 = vpop.f32.mrf.mxu0
        %v1019 = vadd.f32 %v380, %v1018
        %1020 = vmatmul.bf16.gmra.mxu0 %v446
        %v1021 = vpop.f32.mrf.mxu0
        %v1022 = vadd.f32 %v380, %v1021
        %v1023 = vpop.f32.mrf.mxu0
        %v1024 = vadd.f32 %v380, %v1023
        %1025 = vmatmul.bf16.gmra.mxu0 %v448
        %v1026 = vpop.f32.mrf.mxu0
        %v1027 = vadd.f32 %v380, %v1026
        %v1028 = vpop.f32.mrf.mxu0
        %v1029 = vadd.f32 %v380, %v1028
        %1030 = vdwg.mxu0
        %1031 = vmatpush.bf16.msra.mxu0 %v720
        %1032 = vmatpush.bf16.msra.mxu0 %v716
        %1033 = vmatpush.bf16.msra.mxu0 %v712
        %1034 = vmatpush.bf16.msra.mxu0 %v708
        %1035 = vmatpush.bf16.msra.mxu0 %v704
        %1036 = vmatpush.bf16.msra.mxu0 %v700
        %1037 = vmatpush.bf16.msra.mxu0 %v696
        %1038 = vmatpush.bf16.msra.mxu0 %v692
        %1039 = vmatmul.bf16.gmra.mxu0 %v435
        %v1040 = vpop.f32.mrf.mxu0
        %v1041 = vadd.f32 %v992, %v1040
        %v1042 = vpop.f32.mrf.mxu0
        %v1043 = vadd.f32 %v994, %v1042
        %1044 = vmatmul.bf16.gmra.mxu0 %v437
        %v1045 = vpop.f32.mrf.mxu0
        %v1046 = vadd.f32 %v997, %v1045
        %v1047 = vpop.f32.mrf.mxu0
        %v1048 = vadd.f32 %v999, %v1047
        %1049 = vmatmul.bf16.gmra.mxu0 %v439
        %v1050 = vpop.f32.mrf.mxu0
        %v1051 = vadd.f32 %v1002, %v1050
        %v1052 = vpop.f32.mrf.mxu0
        %v1053 = vadd.f32 %v1004, %v1052
        %1054 = vmatmul.bf16.gmra.mxu0 %v441
        %v1055 = vpop.f32.mrf.mxu0
        %v1056 = vadd.f32 %v1007, %v1055
        %v1057 = vpop.f32.mrf.mxu0
        %v1058 = vadd.f32 %v1009, %v1057
        %1059 = vmatmul.bf16.gmra.mxu0 %v443
        %v1060 = vpop.f32.mrf.mxu0
        %v1061 = vadd.f32 %v1012, %v1060
        %v1062 = vpop.f32.mrf.mxu0
        %v1063 = vadd.f32 %v1014, %v1062
        %1064 = vmatmul.bf16.gmra.mxu0 %v445
        %v1065 = vpop.f32.mrf.mxu0
        %v1066 = vadd.f32 %v1017, %v1065
        %v1067 = vpop.f32.mrf.mxu0
        %v1068 = vadd.f32 %v1019, %v1067
        %1069 = vmatmul.bf16.gmra.mxu0 %v447
        %v1070 = vpop.f32.mrf.mxu0
        %v1071 = vadd.f32 %v1022, %v1070
        %v1072 = vpop.f32.mrf.mxu0
        %v1073 = vadd.f32 %v1024, %v1072
        %1074 = vmatmul.bf16.gmra.mxu0 %v449
        %v1075 = vpop.f32.mrf.mxu0
        %v1076 = vadd.f32 %v1027, %v1075
        %v1077 = vpop.f32.mrf.mxu0
        %v1078 = vadd.f32 %v1029, %v1077
        %1079 = vdwg.mxu0
        %1080 = vmatpush.bf16.msra.mxu0 %v689
        %1081 = vmatpush.bf16.msra.mxu0 %v685
        %1082 = vmatpush.bf16.msra.mxu0 %v681
        %1083 = vmatpush.bf16.msra.mxu0 %v677
        %1084 = vmatpush.bf16.msra.mxu0 %v673
        %1085 = vmatpush.bf16.msra.mxu0 %v669
        %1086 = vmatpush.bf16.msra.mxu0 %v665
        %1087 = vmatpush.bf16.msra.mxu0 %v661
        %1088 = vmatmul.bf16.gmra.mxu0 %v434
        %v1089 = vpop.f32.mrf.mxu0
        %v1090 = vadd.f32 %v381, %v1089
        %v1091 = vpop.f32.mrf.mxu0
        %v1092 = vadd.f32 %v381, %v1091
        %1093 = vmatmul.bf16.gmra.mxu0 %v436
        %v1094 = vpop.f32.mrf.mxu0
        %v1095 = vadd.f32 %v381, %v1094
        %v1096 = vpop.f32.mrf.mxu0
        %v1097 = vadd.f32 %v381, %v1096
        %1098 = vmatmul.bf16.gmra.mxu0 %v438
        %v1099 = vpop.f32.mrf.mxu0
        %v1100 = vadd.f32 %v381, %v1099
        %v1101 = vpop.f32.mrf.mxu0
        %v1102 = vadd.f32 %v381, %v1101
        %1103 = vmatmul.bf16.gmra.mxu0 %v440
        %v1104 = vpop.f32.mrf.mxu0
        %v1105 = vadd.f32 %v381, %v1104
        %v1106 = vpop.f32.mrf.mxu0
        %v1107 = vadd.f32 %v381, %v1106
        %1108 = vmatmul.bf16.gmra.mxu0 %v442
        %v1109 = vpop.f32.mrf.mxu0
        %v1110 = vadd.f32 %v381, %v1109
        %v1111 = vpop.f32.mrf.mxu0
        %v1112 = vadd.f32 %v381, %v1111
        %1113 = vmatmul.bf16.gmra.mxu0 %v444
        %v1114 = vpop.f32.mrf.mxu0
        %v1115 = vadd.f32 %v381, %v1114
        %v1116 = vpop.f32.mrf.mxu0
        %v1117 = vadd.f32 %v381, %v1116
        %1118 = vmatmul.bf16.gmra.mxu0 %v446
        %v1119 = vpop.f32.mrf.mxu0
        %v1120 = vadd.f32 %v381, %v1119
        %v1121 = vpop.f32.mrf.mxu0
        %v1122 = vadd.f32 %v381, %v1121
        %1123 = vmatmul.bf16.gmra.mxu0 %v448
        %v1124 = vpop.f32.mrf.mxu0
        %v1125 = vadd.f32 %v381, %v1124
        %v1126 = vpop.f32.mrf.mxu0
        %v1127 = vadd.f32 %v381, %v1126
        %1128 = vdwg.mxu0
        %1129 = vmatpush.bf16.msra.mxu0 %v721
        %1130 = vmatpush.bf16.msra.mxu0 %v717
        %1131 = vmatpush.bf16.msra.mxu0 %v713
        %1132 = vmatpush.bf16.msra.mxu0 %v709
        %1133 = vmatpush.bf16.msra.mxu0 %v705
        %1134 = vmatpush.bf16.msra.mxu0 %v701
        %1135 = vmatpush.bf16.msra.mxu0 %v697
        %1136 = vmatpush.bf16.msra.mxu0 %v693
        %1137 = vmatmul.bf16.gmra.mxu0 %v435
        %v1138 = vpop.f32.mrf.mxu0
        %v1139 = vadd.f32 %v1090, %v1138
        %v1140 = vpop.f32.mrf.mxu0
        %v1141 = vadd.f32 %v1092, %v1140
        %1142 = vmatmul.bf16.gmra.mxu0 %v437
        %v1143 = vpop.f32.mrf.mxu0
        %v1144 = vadd.f32 %v1095, %v1143
        %v1145 = vpop.f32.mrf.mxu0
        %v1146 = vadd.f32 %v1097, %v1145
        %1147 = vmatmul.bf16.gmra.mxu0 %v439
        %v1148 = vpop.f32.mrf.mxu0
        %v1149 = vadd.f32 %v1100, %v1148
        %v1150 = vpop.f32.mrf.mxu0
        %v1151 = vadd.f32 %v1102, %v1150
        %1152 = vmatmul.bf16.gmra.mxu0 %v441
        %v1153 = vpop.f32.mrf.mxu0
        %v1154 = vadd.f32 %v1105, %v1153
        %v1155 = vpop.f32.mrf.mxu0
        %v1156 = vadd.f32 %v1107, %v1155
        %1157 = vmatmul.bf16.gmra.mxu0 %v443
        %v1158 = vpop.f32.mrf.mxu0
        %v1159 = vadd.f32 %v1110, %v1158
        %v1160 = vpop.f32.mrf.mxu0
        %v1161 = vadd.f32 %v1112, %v1160
        %1162 = vmatmul.bf16.gmra.mxu0 %v445
        %v1163 = vpop.f32.mrf.mxu0
        %v1164 = vadd.f32 %v1115, %v1163
        %v1165 = vpop.f32.mrf.mxu0
        %v1166 = vadd.f32 %v1117, %v1165
        %1167 = vmatmul.bf16.gmra.mxu0 %v447
        %v1168 = vpop.f32.mrf.mxu0
        %v1169 = vadd.f32 %v1120, %v1168
        %v1170 = vpop.f32.mrf.mxu0
        %v1171 = vadd.f32 %v1122, %v1170
        %1172 = vmatmul.bf16.gmra.mxu0 %v449
        %v1173 = vpop.f32.mrf.mxu0
        %v1174 = vadd.f32 %v1125, %v1173
        %v1175 = vpop.f32.mrf.mxu0
        %v1176 = vadd.f32 %v1127, %v1175
        %1177 = vdwg.mxu0
        %v1178 = vmul.f32 %v845, %v845
        %v1179 = vmul.f32 %v943, %v943
        %v1180 = vmul.f32 %v1041, %v1041
        %v1181 = vmul.f32 %v1139, %v1139
        %v1182 = vmul.f32 %v847, %v847
        %v1183 = vmul.f32 %v945, %v945
        %v1184 = vmul.f32 %v1043, %v1043
        %v1185 = vmul.f32 %v1141, %v1141
        %v1186 = vmul.f32 %v850, %v850
        %v1187 = vmul.f32 %v948, %v948
        %v1188 = vmul.f32 %v1046, %v1046
        %v1189 = vmul.f32 %v1144, %v1144
        %v1190 = vmul.f32 %v852, %v852
        %v1191 = vmul.f32 %v950, %v950
        %v1192 = vmul.f32 %v1048, %v1048
        %v1193 = vmul.f32 %v1146, %v1146
        %v1194 = vmul.f32 %v855, %v855
        %v1195 = vmul.f32 %v953, %v953
        %v1196 = vmul.f32 %v1051, %v1051
        %v1197 = vmul.f32 %v1149, %v1149
        %v1198 = vmul.f32 %v857, %v857
        %v1199 = vmul.f32 %v955, %v955
        %v1200 = vmul.f32 %v1053, %v1053
        %v1201 = vmul.f32 %v1151, %v1151
        %v1202 = vmul.f32 %v860, %v860
        %v1203 = vmul.f32 %v958, %v958
        %v1204 = vmul.f32 %v1056, %v1056
        %v1205 = vmul.f32 %v1154, %v1154
        %v1206 = vmul.f32 %v862, %v862
        %v1207 = vmul.f32 %v960, %v960
        %v1208 = vmul.f32 %v1058, %v1058
        %v1209 = vmul.f32 %v1156, %v1156
        %v1210 = vmul.f32 %v865, %v865
        %v1211 = vmul.f32 %v963, %v963
        %v1212 = vmul.f32 %v1061, %v1061
        %v1213 = vmul.f32 %v1159, %v1159
        %v1214 = vmul.f32 %v867, %v867
        %v1215 = vmul.f32 %v965, %v965
        %v1216 = vmul.f32 %v1063, %v1063
        %v1217 = vmul.f32 %v1161, %v1161
        %v1218 = vmul.f32 %v870, %v870
        %v1219 = vmul.f32 %v968, %v968
        %v1220 = vmul.f32 %v1066, %v1066
        %v1221 = vmul.f32 %v1164, %v1164
        %v1222 = vmul.f32 %v872, %v872
        %v1223 = vmul.f32 %v970, %v970
        %v1224 = vmul.f32 %v1068, %v1068
        %v1225 = vmul.f32 %v1166, %v1166
        %v1226 = vmul.f32 %v875, %v875
        %v1227 = vmul.f32 %v973, %v973
        %v1228 = vmul.f32 %v1071, %v1071
        %v1229 = vmul.f32 %v1169, %v1169
        %v1230 = vmul.f32 %v877, %v877
        %v1231 = vmul.f32 %v975, %v975
        %v1232 = vmul.f32 %v1073, %v1073
        %v1233 = vmul.f32 %v1171, %v1171
        %v1234 = vmul.f32 %v880, %v880
        %v1235 = vmul.f32 %v978, %v978
        %v1236 = vmul.f32 %v1076, %v1076
        %v1237 = vmul.f32 %v1174, %v1174
        %v1238 = vmul.f32 %v882, %v882
        %v1239 = vmul.f32 %v980, %v980
        %v1240 = vmul.f32 %v1078, %v1078
        %v1241 = vmul.f32 %v1176, %v1176
        %v1242 = vmul.f32 %v845, %v1178
        %v1243 = vmul.f32 %v943, %v1179
        %v1244 = vmul.f32 %v1041, %v1180
        %v1245 = vmul.f32 %v1139, %v1181
        %v1246 = vmul.f32 %v847, %v1182
        %v1247 = vmul.f32 %v945, %v1183
        %v1248 = vmul.f32 %v1043, %v1184
        %v1249 = vmul.f32 %v1141, %v1185
        %v1250 = vmul.f32 %v850, %v1186
        %v1251 = vmul.f32 %v948, %v1187
        %v1252 = vmul.f32 %v1046, %v1188
        %v1253 = vmul.f32 %v1144, %v1189
        %v1254 = vmul.f32 %v852, %v1190
        %v1255 = vmul.f32 %v950, %v1191
        %v1256 = vmul.f32 %v1048, %v1192
        %v1257 = vmul.f32 %v1146, %v1193
        %v1258 = vmul.f32 %v855, %v1194
        %v1259 = vmul.f32 %v953, %v1195
        %v1260 = vmul.f32 %v1051, %v1196
        %v1261 = vmul.f32 %v1149, %v1197
        %v1262 = vmul.f32 %v857, %v1198
        %v1263 = vmul.f32 %v955, %v1199
        %v1264 = vmul.f32 %v1053, %v1200
        %v1265 = vmul.f32 %v1151, %v1201
        %v1266 = vmul.f32 %v860, %v1202
        %v1267 = vmul.f32 %v958, %v1203
        %v1268 = vmul.f32 %v1056, %v1204
        %v1269 = vmul.f32 %v1154, %v1205
        %v1270 = vmul.f32 %v862, %v1206
        %v1271 = vmul.f32 %v960, %v1207
        %v1272 = vmul.f32 %v1058, %v1208
        %v1273 = vmul.f32 %v1156, %v1209
        %v1274 = vmul.f32 %v865, %v1210
        %v1275 = vmul.f32 %v963, %v1211
        %v1276 = vmul.f32 %v1061, %v1212
        %v1277 = vmul.f32 %v1159, %v1213
        %v1278 = vmul.f32 %v867, %v1214
        %v1279 = vmul.f32 %v965, %v1215
        %v1280 = vmul.f32 %v1063, %v1216
        %v1281 = vmul.f32 %v1161, %v1217
        %v1282 = vmul.f32 %v870, %v1218
        %v1283 = vmul.f32 %v968, %v1219
        %v1284 = vmul.f32 %v1066, %v1220
        %v1285 = vmul.f32 %v1164, %v1221
        %v1286 = vmul.f32 %v872, %v1222
        %v1287 = vmul.f32 %v970, %v1223
        %v1288 = vmul.f32 %v1068, %v1224
        %v1289 = vmul.f32 %v1166, %v1225
        %v1290 = vmul.f32 %v875, %v1226
        %v1291 = vmul.f32 %v973, %v1227
        %v1292 = vmul.f32 %v1071, %v1228
        %v1293 = vmul.f32 %v1169, %v1229
        %v1294 = vmul.f32 %v877, %v1230
        %v1295 = vmul.f32 %v975, %v1231
        %v1296 = vmul.f32 %v1073, %v1232
        %v1297 = vmul.f32 %v1171, %v1233
        %v1298 = vmul.f32 %v880, %v1234
        %v1299 = vmul.f32 %v978, %v1235
        %v1300 = vmul.f32 %v1076, %v1236
        %v1301 = vmul.f32 %v1174, %v1237
        %v1302 = vmul.f32 %v882, %v1238
        %v1303 = vmul.f32 %v980, %v1239
        %v1304 = vmul.f32 %v1078, %v1240
        %v1305 = vmul.f32 %v1176, %v1241
        %v1306 = vmul.f32 %v1242, 0.044715
        %v1307 = vmul.f32 %v1243, 0.044715
        %v1308 = vmul.f32 %v1244, 0.044715
        %v1309 = vmul.f32 %v1245, 0.044715
        %v1310 = vmul.f32 %v1246, 0.044715
        %v1311 = vmul.f32 %v1247, 0.044715
        %v1312 = vmul.f32 %v1248, 0.044715
        %v1313 = vmul.f32 %v1249, 0.044715
        %v1314 = vmul.f32 %v1250, 0.044715
        %v1315 = vmul.f32 %v1251, 0.044715
        %v1316 = vmul.f32 %v1252, 0.044715
        %v1317 = vmul.f32 %v1253, 0.044715
        %v1318 = vmul.f32 %v1254, 0.044715
        %v1319 = vmul.f32 %v1255, 0.044715
        %v1320 = vmul.f32 %v1256, 0.044715
        %v1321 = vmul.f32 %v1257, 0.044715
        %v1322 = vmul.f32 %v1258, 0.044715
        %v1323 = vmul.f32 %v1259, 0.044715
        %v1324 = vmul.f32 %v1260, 0.044715
        %v1325 = vmul.f32 %v1261, 0.044715
        %v1326 = vmul.f32 %v1262, 0.044715
        %v1327 = vmul.f32 %v1263, 0.044715
        %v1328 = vmul.f32 %v1264, 0.044715
        %v1329 = vmul.f32 %v1265, 0.044715
        %v1330 = vmul.f32 %v1266, 0.044715
        %v1331 = vmul.f32 %v1267, 0.044715
        %v1332 = vmul.f32 %v1268, 0.044715
        %v1333 = vmul.f32 %v1269, 0.044715
        %v1334 = vmul.f32 %v1270, 0.044715
        %v1335 = vmul.f32 %v1271, 0.044715
        %v1336 = vmul.f32 %v1272, 0.044715
        %v1337 = vmul.f32 %v1273, 0.044715
        %v1338 = vmul.f32 %v1274, 0.044715
        %v1339 = vmul.f32 %v1275, 0.044715
        %v1340 = vmul.f32 %v1276, 0.044715
        %v1341 = vmul.f32 %v1277, 0.044715
        %v1342 = vmul.f32 %v1278, 0.044715
        %v1343 = vmul.f32 %v1279, 0.044715
        %v1344 = vmul.f32 %v1280, 0.044715
        %v1345 = vmul.f32 %v1281, 0.044715
        %v1346 = vmul.f32 %v1282, 0.044715
        %v1347 = vmul.f32 %v1283, 0.044715
        %v1348 = vmul.f32 %v1284, 0.044715
        %v1349 = vmul.f32 %v1285, 0.044715
        %v1350 = vmul.f32 %v1286, 0.044715
        %v1351 = vmul.f32 %v1287, 0.044715
        %v1352 = vmul.f32 %v1288, 0.044715
        %v1353 = vmul.f32 %v1289, 0.044715
        %v1354 = vmul.f32 %v1290, 0.044715
        %v1355 = vmul.f32 %v1291, 0.044715
        %v1356 = vmul.f32 %v1292, 0.044715
        %v1357 = vmul.f32 %v1293, 0.044715
        %v1358 = vmul.f32 %v1294, 0.044715
        %v1359 = vmul.f32 %v1295, 0.044715
        %v1360 = vmul.f32 %v1296, 0.044715
        %v1361 = vmul.f32 %v1297, 0.044715
        %v1362 = vmul.f32 %v1298, 0.044715
        %v1363 = vmul.f32 %v1299, 0.044715
        %v1364 = vmul.f32 %v1300, 0.044715
        %v1365 = vmul.f32 %v1301, 0.044715
        %v1366 = vmul.f32 %v1302, 0.044715
        %v1367 = vmul.f32 %v1303, 0.044715
        %v1368 = vmul.f32 %v1304, 0.044715
        %v1369 = vmul.f32 %v1305, 0.044715
        %v1370 = vadd.f32 %v845, %v1306
        %v1371 = vadd.f32 %v943, %v1307
        %v1372 = vadd.f32 %v1041, %v1308
        %v1373 = vadd.f32 %v1139, %v1309
        %v1374 = vadd.f32 %v847, %v1310
        %v1375 = vadd.f32 %v945, %v1311
        %v1376 = vadd.f32 %v1043, %v1312
        %v1377 = vadd.f32 %v1141, %v1313
        %v1378 = vadd.f32 %v850, %v1314
        %v1379 = vadd.f32 %v948, %v1315
        %v1380 = vadd.f32 %v1046, %v1316
        %v1381 = vadd.f32 %v1144, %v1317
        %v1382 = vadd.f32 %v852, %v1318
        %v1383 = vadd.f32 %v950, %v1319
        %v1384 = vadd.f32 %v1048, %v1320
        %v1385 = vadd.f32 %v1146, %v1321
        %v1386 = vadd.f32 %v855, %v1322
        %v1387 = vadd.f32 %v953, %v1323
        %v1388 = vadd.f32 %v1051, %v1324
        %v1389 = vadd.f32 %v1149, %v1325
        %v1390 = vadd.f32 %v857, %v1326
        %v1391 = vadd.f32 %v955, %v1327
        %v1392 = vadd.f32 %v1053, %v1328
        %v1393 = vadd.f32 %v1151, %v1329
        %v1394 = vadd.f32 %v860, %v1330
        %v1395 = vadd.f32 %v958, %v1331
        %v1396 = vadd.f32 %v1056, %v1332
        %v1397 = vadd.f32 %v1154, %v1333
        %v1398 = vadd.f32 %v862, %v1334
        %v1399 = vadd.f32 %v960, %v1335
        %v1400 = vadd.f32 %v1058, %v1336
        %v1401 = vadd.f32 %v1156, %v1337
        %v1402 = vadd.f32 %v865, %v1338
        %v1403 = vadd.f32 %v963, %v1339
        %v1404 = vadd.f32 %v1061, %v1340
        %v1405 = vadd.f32 %v1159, %v1341
        %v1406 = vadd.f32 %v867, %v1342
        %v1407 = vadd.f32 %v965, %v1343
        %v1408 = vadd.f32 %v1063, %v1344
        %v1409 = vadd.f32 %v1161, %v1345
        %v1410 = vadd.f32 %v870, %v1346
        %v1411 = vadd.f32 %v968, %v1347
        %v1412 = vadd.f32 %v1066, %v1348
        %v1413 = vadd.f32 %v1164, %v1349
        %v1414 = vadd.f32 %v872, %v1350
        %v1415 = vadd.f32 %v970, %v1351
        %v1416 = vadd.f32 %v1068, %v1352
        %v1417 = vadd.f32 %v1166, %v1353
        %v1418 = vadd.f32 %v875, %v1354
        %v1419 = vadd.f32 %v973, %v1355
        %v1420 = vadd.f32 %v1071, %v1356
        %v1421 = vadd.f32 %v1169, %v1357
        %v1422 = vadd.f32 %v877, %v1358
        %v1423 = vadd.f32 %v975, %v1359
        %v1424 = vadd.f32 %v1073, %v1360
        %v1425 = vadd.f32 %v1171, %v1361
        %v1426 = vadd.f32 %v880, %v1362
        %v1427 = vadd.f32 %v978, %v1363
        %v1428 = vadd.f32 %v1076, %v1364
        %v1429 = vadd.f32 %v1174, %v1365
        %v1430 = vadd.f32 %v882, %v1366
        %v1431 = vadd.f32 %v980, %v1367
        %v1432 = vadd.f32 %v1078, %v1368
        %v1433 = vadd.f32 %v1176, %v1369
        %v1434 = vmul.f32 %v1370, 0.7978846
        %v1435 = vmul.f32 %v1371, 0.7978846
        %v1436 = vmul.f32 %v1372, 0.7978846
        %v1437 = vmul.f32 %v1373, 0.7978846
        %v1438 = vmul.f32 %v1374, 0.7978846
        %v1439 = vmul.f32 %v1375, 0.7978846
        %v1440 = vmul.f32 %v1376, 0.7978846
        %v1441 = vmul.f32 %v1377, 0.7978846
        %v1442 = vmul.f32 %v1378, 0.7978846
        %v1443 = vmul.f32 %v1379, 0.7978846
        %v1444 = vmul.f32 %v1380, 0.7978846
        %v1445 = vmul.f32 %v1381, 0.7978846
        %v1446 = vmul.f32 %v1382, 0.7978846
        %v1447 = vmul.f32 %v1383, 0.7978846
        %v1448 = vmul.f32 %v1384, 0.7978846
        %v1449 = vmul.f32 %v1385, 0.7978846
        %v1450 = vmul.f32 %v1386, 0.7978846
        %v1451 = vmul.f32 %v1387, 0.7978846
        %v1452 = vmul.f32 %v1388, 0.7978846
        %v1453 = vmul.f32 %v1389, 0.7978846
        %v1454 = vmul.f32 %v1390, 0.7978846
        %v1455 = vmul.f32 %v1391, 0.7978846
        %v1456 = vmul.f32 %v1392, 0.7978846
        %v1457 = vmul.f32 %v1393, 0.7978846
        %v1458 = vmul.f32 %v1394, 0.7978846
        %v1459 = vmul.f32 %v1395, 0.7978846
        %v1460 = vmul.f32 %v1396, 0.7978846
        %v1461 = vmul.f32 %v1397, 0.7978846
        %v1462 = vmul.f32 %v1398, 0.7978846
        %v1463 = vmul.f32 %v1399, 0.7978846
        %v1464 = vmul.f32 %v1400, 0.7978846
        %v1465 = vmul.f32 %v1401, 0.7978846
        %v1466 = vmul.f32 %v1402, 0.7978846
        %v1467 = vmul.f32 %v1403, 0.7978846
        %v1468 = vmul.f32 %v1404, 0.7978846
        %v1469 = vmul.f32 %v1405, 0.7978846
        %v1470 = vmul.f32 %v1406, 0.7978846
        %v1471 = vmul.f32 %v1407, 0.7978846
        %v1472 = vmul.f32 %v1408, 0.7978846
        %v1473 = vmul.f32 %v1409, 0.7978846
        %v1474 = vmul.f32 %v1410, 0.7978846
        %v1475 = vmul.f32 %v1411, 0.7978846
        %v1476 = vmul.f32 %v1412, 0.7978846
        %v1477 = vmul.f32 %v1413, 0.7978846
        %v1478 = vmul.f32 %v1414, 0.7978846
        %v1479 = vmul.f32 %v1415, 0.7978846
        %v1480 = vmul.f32 %v1416, 0.7978846
        %v1481 = vmul.f32 %v1417, 0.7978846
        %v1482 = vmul.f32 %v1418, 0.7978846
        %v1483 = vmul.f32 %v1419, 0.7978846
        %v1484 = vmul.f32 %v1420, 0.7978846
        %v1485 = vmul.f32 %v1421, 0.7978846
        %v1486 = vmul.f32 %v1422, 0.7978846
        %v1487 = vmul.f32 %v1423, 0.7978846
        %v1488 = vmul.f32 %v1424, 0.7978846
        %v1489 = vmul.f32 %v1425, 0.7978846
        %v1490 = vmul.f32 %v1426, 0.7978846
        %v1491 = vmul.f32 %v1427, 0.7978846
        %v1492 = vmul.f32 %v1428, 0.7978846
        %v1493 = vmul.f32 %v1429, 0.7978846
        %v1494 = vmul.f32 %v1430, 0.7978846
        %v1495 = vmul.f32 %v1431, 0.7978846
        %v1496 = vmul.f32 %v1432, 0.7978846
        %v1497 = vmul.f32 %v1433, 0.7978846
        %v1498 = vtanh.pop %v1434
        %v1499 = vtanh.pop %v1435
        %v1500 = vtanh.pop %v1436
        %v1501 = vtanh.pop %v1437
        %v1502 = vtanh.pop %v1438
        %v1503 = vtanh.pop %v1439
        %v1504 = vtanh.pop %v1440
        %v1505 = vtanh.pop %v1441
        %v1506 = vtanh.pop %v1442
        %v1507 = vtanh.pop %v1443
        %v1508 = vtanh.pop %v1444
        %v1509 = vtanh.pop %v1445
        %v1510 = vtanh.pop %v1446
        %v1511 = vtanh.pop %v1447
        %v1512 = vtanh.pop %v1448
        %v1513 = vtanh.pop %v1449
        %v1514 = vtanh.pop %v1450
        %v1515 = vtanh.pop %v1451
        %v1516 = vtanh.pop %v1452
        %v1517 = vtanh.pop %v1453
        %v1518 = vtanh.pop %v1454
        %v1519 = vtanh.pop %v1455
        %v1520 = vtanh.pop %v1456
        %v1521 = vtanh.pop %v1457
        %v1522 = vtanh.pop %v1458
        %v1523 = vtanh.pop %v1459
        %v1524 = vtanh.pop %v1460
        %v1525 = vtanh.pop %v1461
        %v1526 = vtanh.pop %v1462
        %v1527 = vtanh.pop %v1463
        %v1528 = vtanh.pop %v1464
        %v1529 = vtanh.pop %v1465
        %v1530 = vtanh.pop %v1466
        %v1531 = vtanh.pop %v1467
        %v1532 = vtanh.pop %v1468
        %v1533 = vtanh.pop %v1469
        %v1534 = vtanh.pop %v1470
        %v1535 = vtanh.pop %v1471
        %v1536 = vtanh.pop %v1472
        %v1537 = vtanh.pop %v1473
        %v1538 = vtanh.pop %v1474
        %v1539 = vtanh.pop %v1475
        %v1540 = vtanh.pop %v1476
        %v1541 = vtanh.pop %v1477
        %v1542 = vtanh.pop %v1478
        %v1543 = vtanh.pop %v1479
        %v1544 = vtanh.pop %v1480
        %v1545 = vtanh.pop %v1481
        %v1546 = vtanh.pop %v1482
        %v1547 = vtanh.pop %v1483
        %v1548 = vtanh.pop %v1484
        %v1549 = vtanh.pop %v1485
        %v1550 = vtanh.pop %v1486
        %v1551 = vtanh.pop %v1487
        %v1552 = vtanh.pop %v1488
        %v1553 = vtanh.pop %v1489
        %v1554 = vtanh.pop %v1490
        %v1555 = vtanh.pop %v1491
        %v1556 = vtanh.pop %v1492
        %v1557 = vtanh.pop %v1493
        %v1558 = vtanh.pop %v1494
        %v1559 = vtanh.pop %v1495
        %v1560 = vtanh.pop %v1496
        %v1561 = vtanh.pop %v1497
        %v1562 = vadd.f32 %v1498, 1.0
        %v1563 = vadd.f32 %v1499, 1.0
        %v1564 = vadd.f32 %v1500, 1.0
        %v1565 = vadd.f32 %v1501, 1.0
        %v1566 = vadd.f32 %v1502, 1.0
        %v1567 = vadd.f32 %v1503, 1.0
        %v1568 = vadd.f32 %v1504, 1.0
        %v1569 = vadd.f32 %v1505, 1.0
        %v1570 = vadd.f32 %v1506, 1.0
        %v1571 = vadd.f32 %v1507, 1.0
        %v1572 = vadd.f32 %v1508, 1.0
        %v1573 = vadd.f32 %v1509, 1.0
        %v1574 = vadd.f32 %v1510, 1.0
        %v1575 = vadd.f32 %v1511, 1.0
        %v1576 = vadd.f32 %v1512, 1.0
        %v1577 = vadd.f32 %v1513, 1.0
        %v1578 = vadd.f32 %v1514, 1.0
        %v1579 = vadd.f32 %v1515, 1.0
        %v1580 = vadd.f32 %v1516, 1.0
        %v1581 = vadd.f32 %v1517, 1.0
        %v1582 = vadd.f32 %v1518, 1.0
        %v1583 = vadd.f32 %v1519, 1.0
        %v1584 = vadd.f32 %v1520, 1.0
        %v1585 = vadd.f32 %v1521, 1.0
        %v1586 = vadd.f32 %v1522, 1.0
        %v1587 = vadd.f32 %v1523, 1.0
        %v1588 = vadd.f32 %v1524, 1.0
        %v1589 = vadd.f32 %v1525, 1.0
        %v1590 = vadd.f32 %v1526, 1.0
        %v1591 = vadd.f32 %v1527, 1.0
        %v1592 = vadd.f32 %v1528, 1.0
        %v1593 = vadd.f32 %v1529, 1.0
        %v1594 = vadd.f32 %v1530, 1.0
        %v1595 = vadd.f32 %v1531, 1.0
        %v1596 = vadd.f32 %v1532, 1.0
        %v1597 = vadd.f32 %v1533, 1.0
        %v1598 = vadd.f32 %v1534, 1.0
        %v1599 = vadd.f32 %v1535, 1.0
        %v1600 = vadd.f32 %v1536, 1.0
        %v1601 = vadd.f32 %v1537, 1.0
        %v1602 = vadd.f32 %v1538, 1.0
        %v1603 = vadd.f32 %v1539, 1.0
        %v1604 = vadd.f32 %v1540, 1.0
        %v1605 = vadd.f32 %v1541, 1.0
        %v1606 = vadd.f32 %v1542, 1.0
        %v1607 = vadd.f32 %v1543, 1.0
        %v1608 = vadd.f32 %v1544, 1.0
        %v1609 = vadd.f32 %v1545, 1.0
        %v1610 = vadd.f32 %v1546, 1.0
        %v1611 = vadd.f32 %v1547, 1.0
        %v1612 = vadd.f32 %v1548, 1.0
        %v1613 = vadd.f32 %v1549, 1.0
        %v1614 = vadd.f32 %v1550, 1.0
        %v1615 = vadd.f32 %v1551, 1.0
        %v1616 = vadd.f32 %v1552, 1.0
        %v1617 = vadd.f32 %v1553, 1.0
        %v1618 = vadd.f32 %v1554, 1.0
        %v1619 = vadd.f32 %v1555, 1.0
        %v1620 = vadd.f32 %v1556, 1.0
        %v1621 = vadd.f32 %v1557, 1.0
        %v1622 = vadd.f32 %v1558, 1.0
        %v1623 = vadd.f32 %v1559, 1.0
        %v1624 = vadd.f32 %v1560, 1.0
        %v1625 = vadd.f32 %v1561, 1.0
        %v1626 = vmul.f32 %v1562, 0.5
        %v1627 = vmul.f32 %v1563, 0.5
        %v1628 = vmul.f32 %v1564, 0.5
        %v1629 = vmul.f32 %v1565, 0.5
        %v1630 = vmul.f32 %v1566, 0.5
        %v1631 = vmul.f32 %v1567, 0.5
        %v1632 = vmul.f32 %v1568, 0.5
        %v1633 = vmul.f32 %v1569, 0.5
        %v1634 = vmul.f32 %v1570, 0.5
        %v1635 = vmul.f32 %v1571, 0.5
        %v1636 = vmul.f32 %v1572, 0.5
        %v1637 = vmul.f32 %v1573, 0.5
        %v1638 = vmul.f32 %v1574, 0.5
        %v1639 = vmul.f32 %v1575, 0.5
        %v1640 = vmul.f32 %v1576, 0.5
        %v1641 = vmul.f32 %v1577, 0.5
        %v1642 = vmul.f32 %v1578, 0.5
        %v1643 = vmul.f32 %v1579, 0.5
        %v1644 = vmul.f32 %v1580, 0.5
        %v1645 = vmul.f32 %v1581, 0.5
        %v1646 = vmul.f32 %v1582, 0.5
        %v1647 = vmul.f32 %v1583, 0.5
        %v1648 = vmul.f32 %v1584, 0.5
        %v1649 = vmul.f32 %v1585, 0.5
        %v1650 = vmul.f32 %v1586, 0.5
        %v1651 = vmul.f32 %v1587, 0.5
        %v1652 = vmul.f32 %v1588, 0.5
        %v1653 = vmul.f32 %v1589, 0.5
        %v1654 = vmul.f32 %v1590, 0.5
        %v1655 = vmul.f32 %v1591, 0.5
        %v1656 = vmul.f32 %v1592, 0.5
        %v1657 = vmul.f32 %v1593, 0.5
        %v1658 = vmul.f32 %v1594, 0.5
        %v1659 = vmul.f32 %v1595, 0.5
        %v1660 = vmul.f32 %v1596, 0.5
        %v1661 = vmul.f32 %v1597, 0.5
        %v1662 = vmul.f32 %v1598, 0.5
        %v1663 = vmul.f32 %v1599, 0.5
        %v1664 = vmul.f32 %v1600, 0.5
        %v1665 = vmul.f32 %v1601, 0.5
        %v1666 = vmul.f32 %v1602, 0.5
        %v1667 = vmul.f32 %v1603, 0.5
        %v1668 = vmul.f32 %v1604, 0.5
        %v1669 = vmul.f32 %v1605, 0.5
        %v1670 = vmul.f32 %v1606, 0.5
        %v1671 = vmul.f32 %v1607, 0.5
        %v1672 = vmul.f32 %v1608, 0.5
        %v1673 = vmul.f32 %v1609, 0.5
        %v1674 = vmul.f32 %v1610, 0.5
        %v1675 = vmul.f32 %v1611, 0.5
        %v1676 = vmul.f32 %v1612, 0.5
        %v1677 = vmul.f32 %v1613, 0.5
        %v1678 = vmul.f32 %v1614, 0.5
        %v1679 = vmul.f32 %v1615, 0.5
        %v1680 = vmul.f32 %v1616, 0.5
        %v1681 = vmul.f32 %v1617, 0.5
        %v1682 = vmul.f32 %v1618, 0.5
        %v1683 = vmul.f32 %v1619, 0.5
        %v1684 = vmul.f32 %v1620, 0.5
        %v1685 = vmul.f32 %v1621, 0.5
        %v1686 = vmul.f32 %v1622, 0.5
        %v1687 = vmul.f32 %v1623, 0.5
        %v1688 = vmul.f32 %v1624, 0.5
        %v1689 = vmul.f32 %v1625, 0.5
        %v1690 = vmul.f32 %v845, %v1626
        %v1691 = vmul.f32 %v943, %v1627
        %v1692 = vmul.f32 %v1041, %v1628
        %v1693 = vmul.f32 %v1139, %v1629
        %v1694 = vmul.f32 %v847, %v1630
        %v1695 = vmul.f32 %v945, %v1631
        %v1696 = vmul.f32 %v1043, %v1632
        %v1697 = vmul.f32 %v1141, %v1633
        %v1698 = vmul.f32 %v850, %v1634
        %v1699 = vmul.f32 %v948, %v1635
        %v1700 = vmul.f32 %v1046, %v1636
        %v1701 = vmul.f32 %v1144, %v1637
        %v1702 = vmul.f32 %v852, %v1638
        %v1703 = vmul.f32 %v950, %v1639
        %v1704 = vmul.f32 %v1048, %v1640
        %v1705 = vmul.f32 %v1146, %v1641
        %v1706 = vmul.f32 %v855, %v1642
        %v1707 = vmul.f32 %v953, %v1643
        %v1708 = vmul.f32 %v1051, %v1644
        %v1709 = vmul.f32 %v1149, %v1645
        %v1710 = vmul.f32 %v857, %v1646
        %v1711 = vmul.f32 %v955, %v1647
        %v1712 = vmul.f32 %v1053, %v1648
        %v1713 = vmul.f32 %v1151, %v1649
        %v1714 = vmul.f32 %v860, %v1650
        %v1715 = vmul.f32 %v958, %v1651
        %v1716 = vmul.f32 %v1056, %v1652
        %v1717 = vmul.f32 %v1154, %v1653
        %v1718 = vmul.f32 %v862, %v1654
        %v1719 = vmul.f32 %v960, %v1655
        %v1720 = vmul.f32 %v1058, %v1656
        %v1721 = vmul.f32 %v1156, %v1657
        %v1722 = vmul.f32 %v865, %v1658
        %v1723 = vmul.f32 %v963, %v1659
        %v1724 = vmul.f32 %v1061, %v1660
        %v1725 = vmul.f32 %v1159, %v1661
        %v1726 = vmul.f32 %v867, %v1662
        %v1727 = vmul.f32 %v965, %v1663
        %v1728 = vmul.f32 %v1063, %v1664
        %v1729 = vmul.f32 %v1161, %v1665
        %v1730 = vmul.f32 %v870, %v1666
        %v1731 = vmul.f32 %v968, %v1667
        %v1732 = vmul.f32 %v1066, %v1668
        %v1733 = vmul.f32 %v1164, %v1669
        %v1734 = vmul.f32 %v872, %v1670
        %v1735 = vmul.f32 %v970, %v1671
        %v1736 = vmul.f32 %v1068, %v1672
        %v1737 = vmul.f32 %v1166, %v1673
        %v1738 = vmul.f32 %v875, %v1674
        %v1739 = vmul.f32 %v973, %v1675
        %v1740 = vmul.f32 %v1071, %v1676
        %v1741 = vmul.f32 %v1169, %v1677
        %v1742 = vmul.f32 %v877, %v1678
        %v1743 = vmul.f32 %v975, %v1679
        %v1744 = vmul.f32 %v1073, %v1680
        %v1745 = vmul.f32 %v1171, %v1681
        %v1746 = vmul.f32 %v880, %v1682
        %v1747 = vmul.f32 %v978, %v1683
        %v1748 = vmul.f32 %v1076, %v1684
        %v1749 = vmul.f32 %v1174, %v1685
        %v1750 = vmul.f32 %v882, %v1686
        %v1751 = vmul.f32 %v980, %v1687
        %v1752 = vmul.f32 %v1078, %v1688
        %v1753 = vmul.f32 %v1176, %v1689
        %v1754 = vpack.c.bf16 %v1694, %v1690
        %v1755 = vpack.c.bf16 %v1695, %v1691
        %v1756 = vpack.c.bf16 %v1696, %v1692
        %v1757 = vpack.c.bf16 %v1697, %v1693
        %v1758 = vpack.c.bf16 %v1702, %v1698
        %v1759 = vpack.c.bf16 %v1703, %v1699
        %v1760 = vpack.c.bf16 %v1704, %v1700
        %v1761 = vpack.c.bf16 %v1705, %v1701
        %v1762 = vpack.c.bf16 %v1710, %v1706
        %v1763 = vpack.c.bf16 %v1711, %v1707
        %v1764 = vpack.c.bf16 %v1712, %v1708
        %v1765 = vpack.c.bf16 %v1713, %v1709
        %v1766 = vpack.c.bf16 %v1718, %v1714
        %v1767 = vpack.c.bf16 %v1719, %v1715
        %v1768 = vpack.c.bf16 %v1720, %v1716
        %v1769 = vpack.c.bf16 %v1721, %v1717
        %v1770 = vpack.c.bf16 %v1726, %v1722
        %v1771 = vpack.c.bf16 %v1727, %v1723
        %v1772 = vpack.c.bf16 %v1728, %v1724
        %v1773 = vpack.c.bf16 %v1729, %v1725
        %v1774 = vpack.c.bf16 %v1734, %v1730
        %v1775 = vpack.c.bf16 %v1735, %v1731
        %v1776 = vpack.c.bf16 %v1736, %v1732
        %v1777 = vpack.c.bf16 %v1737, %v1733
        %v1778 = vpack.c.bf16 %v1742, %v1738
        %v1779 = vpack.c.bf16 %v1743, %v1739
        %v1780 = vpack.c.bf16 %v1744, %v1740
        %v1781 = vpack.c.bf16 %v1745, %v1741
        %v1782 = vpack.c.bf16 %v1750, %v1746
        %v1783 = vpack.c.bf16 %v1751, %v1747
        %v1784 = vpack.c.bf16 %v1752, %v1748
        %v1785 = vpack.c.bf16 %v1753, %v1749
        %v1786 = vld [vmem:[#allocation8] sm:$0xff]
        %v1787 = vld [vmem:[#allocation8 + $0x8] sm:$0xff]
        %v1788 = vld [vmem:[#allocation8 + $0x10] sm:$0xff]
        %v1789 = vld [vmem:[#allocation8 + $0x18] sm:$0xff]
        %v1790 = vld [vmem:[#allocation8 + $0x20] sm:$0xff]
        %v1791 = vld [vmem:[#allocation8 + $0x28] sm:$0xff]
        %v1792 = vld [vmem:[#allocation8 + $0x30] sm:$0xff]
        %v1793 = vld [vmem:[#allocation8 + $0x38] sm:$0xff]
        %v1794 = vld [vmem:[#allocation8 + $0x40] sm:$0xff]
        %v1795 = vld [vmem:[#allocation8 + $0x48] sm:$0xff]
        %v1796 = vld [vmem:[#allocation8 + $0x50] sm:$0xff]
        %v1797 = vld [vmem:[#allocation8 + $0x58] sm:$0xff]
        %v1798 = vld [vmem:[#allocation8 + $0x60] sm:$0xff]
        %v1799 = vld [vmem:[#allocation8 + $0x68] sm:$0xff]
        %v1800 = vld [vmem:[#allocation8 + $0x70] sm:$0xff]
        %v1801 = vld [vmem:[#allocation8 + $0x78] sm:$0xff]
        %v1802 = vld [vmem:[#allocation8 + $0x80] sm:$0xff]
        %v1803 = vld [vmem:[#allocation8 + $0x88] sm:$0xff]
        %v1804 = vld [vmem:[#allocation8 + $0x90] sm:$0xff]
        %v1805 = vld [vmem:[#allocation8 + $0x98] sm:$0xff]
        %v1806 = vld [vmem:[#allocation8 + $0xa0] sm:$0xff]
        %v1807 = vld [vmem:[#allocation8 + $0xa8] sm:$0xff]
        %v1808 = vld [vmem:[#allocation8 + $0xb0] sm:$0xff]
        %v1809 = vld [vmem:[#allocation8 + $0xb8] sm:$0xff]
        %v1810 = vld [vmem:[#allocation8 + $0xc0] sm:$0xff]
        %v1811 = vld [vmem:[#allocation8 + $0xc8] sm:$0xff]
        %v1812 = vld [vmem:[#allocation8 + $0xd0] sm:$0xff]
        %v1813 = vld [vmem:[#allocation8 + $0xd8] sm:$0xff]
        %v1814 = vld [vmem:[#allocation8 + $0xe0] sm:$0xff]
        %v1815 = vld [vmem:[#allocation8 + $0xe8] sm:$0xff]
        %v1816 = vld [vmem:[#allocation8 + $0xf0] sm:$0xff]
        %v1817 = vld [vmem:[#allocation8 + $0xf8] sm:$0xff]
        %v1818 = vld [vmem:[#allocation8 + $0x100] sm:$0xff]
        %v1819 = vld [vmem:[#allocation8 + $0x108] sm:$0xff]
        %v1820 = vld [vmem:[#allocation8 + $0x110] sm:$0xff]
        %v1821 = vld [vmem:[#allocation8 + $0x118] sm:$0xff]
        %v1822 = vld [vmem:[#allocation8 + $0x120] sm:$0xff]
        %v1823 = vld [vmem:[#allocation8 + $0x128] sm:$0xff]
        %v1824 = vld [vmem:[#allocation8 + $0x130] sm:$0xff]
        %v1825 = vld [vmem:[#allocation8 + $0x138] sm:$0xff]
        %v1826 = vld [vmem:[#allocation8 + $0x140] sm:$0xff]
        %v1827 = vld [vmem:[#allocation8 + $0x148] sm:$0xff]
        %v1828 = vld [vmem:[#allocation8 + $0x150] sm:$0xff]
        %v1829 = vld [vmem:[#allocation8 + $0x158] sm:$0xff]
        %v1830 = vld [vmem:[#allocation8 + $0x160] sm:$0xff]
        %v1831 = vld [vmem:[#allocation8 + $0x168] sm:$0xff]
        %v1832 = vld [vmem:[#allocation8 + $0x170] sm:$0xff]
        %v1833 = vld [vmem:[#allocation8 + $0x178] sm:$0xff]
        %v1834 = vld [vmem:[#allocation8 + $0x180] sm:$0xff]
        %v1835 = vld [vmem:[#allocation8 + $0x188] sm:$0xff]
        %v1836 = vld [vmem:[#allocation8 + $0x190] sm:$0xff]
        %v1837 = vld [vmem:[#allocation8 + $0x198] sm:$0xff]
        %v1838 = vld [vmem:[#allocation8 + $0x1a0] sm:$0xff]
        %v1839 = vld [vmem:[#allocation8 + $0x1a8] sm:$0xff]
        %v1840 = vld [vmem:[#allocation8 + $0x1b0] sm:$0xff]
        %v1841 = vld [vmem:[#allocation8 + $0x1b8] sm:$0xff]
        %v1842 = vld [vmem:[#allocation8 + $0x1c0] sm:$0xff]
        %v1843 = vld [vmem:[#allocation8 + $0x1c8] sm:$0xff]
        %v1844 = vld [vmem:[#allocation8 + $0x1d0] sm:$0xff]
        %v1845 = vld [vmem:[#allocation8 + $0x1d8] sm:$0xff]
        %v1846 = vld [vmem:[#allocation8 + $0x1e0] sm:$0xff]
        %v1847 = vld [vmem:[#allocation8 + $0x1e8] sm:$0xff]
        %v1848 = vld [vmem:[#allocation8 + $0x1f0] sm:$0xff]
        %v1849 = vld [vmem:[#allocation8 + $0x1f8] sm:$0xff]
        %v1850 = vld [vmem:[%s4] sm:$0x3]
        %v1852 = vperm.slane %v1850, 0
        %v1853 = vperm.slane %v1850, 1
        %v1920 = vunpack.c.l.b16 %v1786
        %v1921 = vunpack.c.h.b16 %v1786
        %v1922 = vunpack.c.l.b16 %v1787
        %v1923 = vunpack.c.h.b16 %v1787
        %v1924 = vunpack.c.l.b16 %v1788
        %v1925 = vunpack.c.h.b16 %v1788
        %v1926 = vunpack.c.l.b16 %v1789
        %v1927 = vunpack.c.h.b16 %v1789
        %v1928 = vunpack.c.l.b16 %v1790
        %v1929 = vunpack.c.h.b16 %v1790
        %v1930 = vunpack.c.l.b16 %v1791
        %v1931 = vunpack.c.h.b16 %v1791
        %v1932 = vunpack.c.l.b16 %v1792
        %v1933 = vunpack.c.h.b16 %v1792
        %v1934 = vunpack.c.l.b16 %v1793
        %v1935 = vunpack.c.h.b16 %v1793
        %v1936 = vunpack.c.l.b16 %v1794
        %v1937 = vunpack.c.h.b16 %v1794
        %v1938 = vunpack.c.l.b16 %v1795
        %v1939 = vunpack.c.h.b16 %v1795
        %v1940 = vunpack.c.l.b16 %v1796
        %v1941 = vunpack.c.h.b16 %v1796
        %v1942 = vunpack.c.l.b16 %v1797
        %v1943 = vunpack.c.h.b16 %v1797
        %v1944 = vunpack.c.l.b16 %v1798
        %v1945 = vunpack.c.h.b16 %v1798
        %v1946 = vunpack.c.l.b16 %v1799
        %v1947 = vunpack.c.h.b16 %v1799
        %v1948 = vunpack.c.l.b16 %v1800
        %v1949 = vunpack.c.h.b16 %v1800
        %v1950 = vunpack.c.l.b16 %v1801
        %v1951 = vunpack.c.h.b16 %v1801
        %v1952 = vunpack.c.l.b16 %v1802
        %v1953 = vunpack.c.h.b16 %v1802
        %v1954 = vunpack.c.l.b16 %v1803
        %v1955 = vunpack.c.h.b16 %v1803
        %v1956 = vunpack.c.l.b16 %v1804
        %v1957 = vunpack.c.h.b16 %v1804
        %v1958 = vunpack.c.l.b16 %v1805
        %v1959 = vunpack.c.h.b16 %v1805
        %v1960 = vunpack.c.l.b16 %v1806
        %v1961 = vunpack.c.h.b16 %v1806
        %v1962 = vunpack.c.l.b16 %v1807
        %v1963 = vunpack.c.h.b16 %v1807
        %v1964 = vunpack.c.l.b16 %v1808
        %v1965 = vunpack.c.h.b16 %v1808
        %v1966 = vunpack.c.l.b16 %v1809
        %v1967 = vunpack.c.h.b16 %v1809
        %v1968 = vunpack.c.l.b16 %v1810
        %v1969 = vunpack.c.h.b16 %v1810
        %v1970 = vunpack.c.l.b16 %v1811
        %v1971 = vunpack.c.h.b16 %v1811
        %v1972 = vunpack.c.l.b16 %v1812
        %v1973 = vunpack.c.h.b16 %v1812
        %v1974 = vunpack.c.l.b16 %v1813
        %v1975 = vunpack.c.h.b16 %v1813
        %v1976 = vunpack.c.l.b16 %v1814
        %v1977 = vunpack.c.h.b16 %v1814
        %v1978 = vunpack.c.l.b16 %v1815
        %v1979 = vunpack.c.h.b16 %v1815
        %v1980 = vunpack.c.l.b16 %v1816
        %v1981 = vunpack.c.h.b16 %v1816
        %v1982 = vunpack.c.l.b16 %v1817
        %v1983 = vunpack.c.h.b16 %v1817
        %v1984 = vunpack.c.l.b16 %v1818
        %v1985 = vunpack.c.h.b16 %v1818
        %v1986 = vunpack.c.l.b16 %v1819
        %v1987 = vunpack.c.h.b16 %v1819
        %v1988 = vunpack.c.l.b16 %v1820
        %v1989 = vunpack.c.h.b16 %v1820
        %v1990 = vunpack.c.l.b16 %v1821
        %v1991 = vunpack.c.h.b16 %v1821
        %v1992 = vunpack.c.l.b16 %v1822
        %v1993 = vunpack.c.h.b16 %v1822
        %v1994 = vunpack.c.l.b16 %v1823
        %v1995 = vunpack.c.h.b16 %v1823
        %v1996 = vunpack.c.l.b16 %v1824
        %v1997 = vunpack.c.h.b16 %v1824
        %v1998 = vunpack.c.l.b16 %v1825
        %v1999 = vunpack.c.h.b16 %v1825
        %v2000 = vunpack.c.l.b16 %v1826
        %v2001 = vunpack.c.h.b16 %v1826
        %v2002 = vunpack.c.l.b16 %v1827
        %v2003 = vunpack.c.h.b16 %v1827
        %v2004 = vunpack.c.l.b16 %v1828
        %v2005 = vunpack.c.h.b16 %v1828
        %v2006 = vunpack.c.l.b16 %v1829
        %v2007 = vunpack.c.h.b16 %v1829
        %v2008 = vunpack.c.l.b16 %v1830
        %v2009 = vunpack.c.h.b16 %v1830
        %v2010 = vunpack.c.l.b16 %v1831
        %v2011 = vunpack.c.h.b16 %v1831
        %v2012 = vunpack.c.l.b16 %v1832
        %v2013 = vunpack.c.h.b16 %v1832
        %v2014 = vunpack.c.l.b16 %v1833
        %v2015 = vunpack.c.h.b16 %v1833
        %v2016 = vunpack.c.l.b16 %v1834
        %v2017 = vunpack.c.h.b16 %v1834
        %v2018 = vunpack.c.l.b16 %v1835
        %v2019 = vunpack.c.h.b16 %v1835
        %v2020 = vunpack.c.l.b16 %v1836
        %v2021 = vunpack.c.h.b16 %v1836
        %v2022 = vunpack.c.l.b16 %v1837
        %v2023 = vunpack.c.h.b16 %v1837
        %v2024 = vunpack.c.l.b16 %v1838
        %v2025 = vunpack.c.h.b16 %v1838
        %v2026 = vunpack.c.l.b16 %v1839
        %v2027 = vunpack.c.h.b16 %v1839
        %v2028 = vunpack.c.l.b16 %v1840
        %v2029 = vunpack.c.h.b16 %v1840
        %v2030 = vunpack.c.l.b16 %v1841
        %v2031 = vunpack.c.h.b16 %v1841
        %v2032 = vunpack.c.l.b16 %v1842
        %v2033 = vunpack.c.h.b16 %v1842
        %v2034 = vunpack.c.l.b16 %v1843
        %v2035 = vunpack.c.h.b16 %v1843
        %v2036 = vunpack.c.l.b16 %v1844
        %v2037 = vunpack.c.h.b16 %v1844
        %v2038 = vunpack.c.l.b16 %v1845
        %v2039 = vunpack.c.h.b16 %v1845
        %v2040 = vunpack.c.l.b16 %v1846
        %v2041 = vunpack.c.h.b16 %v1846
        %v2042 = vunpack.c.l.b16 %v1847
        %v2043 = vunpack.c.h.b16 %v1847
        %v2044 = vunpack.c.l.b16 %v1848
        %v2045 = vunpack.c.h.b16 %v1848
        %v2046 = vunpack.c.l.b16 %v1849
        %v2047 = vunpack.c.h.b16 %v1849
        %v2048 = vpack.c.b16 %v1922, %v1920
        %v2049 = vpack.c.b16 %v1923, %v1921
        %v2050 = vpack.c.b16 %v1926, %v1924
        %v2051 = vpack.c.b16 %v1927, %v1925
        %v2052 = vpack.c.b16 %v1930, %v1928
        %v2053 = vpack.c.b16 %v1931, %v1929
        %v2054 = vpack.c.b16 %v1934, %v1932
        %v2055 = vpack.c.b16 %v1935, %v1933
        %v2056 = vpack.c.b16 %v1938, %v1936
        %v2057 = vpack.c.b16 %v1939, %v1937
        %v2058 = vpack.c.b16 %v1942, %v1940
        %v2059 = vpack.c.b16 %v1943, %v1941
        %v2060 = vpack.c.b16 %v1946, %v1944
        %v2061 = vpack.c.b16 %v1947, %v1945
        %v2062 = vpack.c.b16 %v1950, %v1948
        %v2063 = vpack.c.b16 %v1951, %v1949
        %v2064 = vpack.c.b16 %v1954, %v1952
        %v2065 = vpack.c.b16 %v1955, %v1953
        %v2066 = vpack.c.b16 %v1958, %v1956
        %v2067 = vpack.c.b16 %v1959, %v1957
        %v2068 = vpack.c.b16 %v1962, %v1960
        %v2069 = vpack.c.b16 %v1963, %v1961
        %v2070 = vpack.c.b16 %v1966, %v1964
        %v2071 = vpack.c.b16 %v1967, %v1965
        %v2072 = vpack.c.b16 %v1970, %v1968
        %v2073 = vpack.c.b16 %v1971, %v1969
        %v2074 = vpack.c.b16 %v1974, %v1972
        %v2075 = vpack.c.b16 %v1975, %v1973
        %v2076 = vpack.c.b16 %v1978, %v1976
        %v2077 = vpack.c.b16 %v1979, %v1977
        %v2078 = vpack.c.b16 %v1982, %v1980
        %v2079 = vpack.c.b16 %v1983, %v1981
        %v2080 = vpack.c.b16 %v1986, %v1984
        %v2081 = vpack.c.b16 %v1987, %v1985
        %v2082 = vpack.c.b16 %v1990, %v1988
        %v2083 = vpack.c.b16 %v1991, %v1989
        %v2084 = vpack.c.b16 %v1994, %v1992
        %v2085 = vpack.c.b16 %v1995, %v1993
        %v2086 = vpack.c.b16 %v1998, %v1996
        %v2087 = vpack.c.b16 %v1999, %v1997
        %v2088 = vpack.c.b16 %v2002, %v2000
        %v2089 = vpack.c.b16 %v2003, %v2001
        %v2090 = vpack.c.b16 %v2006, %v2004
        %v2091 = vpack.c.b16 %v2007, %v2005
        %v2092 = vpack.c.b16 %v2010, %v2008
        %v2093 = vpack.c.b16 %v2011, %v2009
        %v2094 = vpack.c.b16 %v2014, %v2012
        %v2095 = vpack.c.b16 %v2015, %v2013
        %v2096 = vpack.c.b16 %v2018, %v2016
        %v2097 = vpack.c.b16 %v2019, %v2017
        %v2098 = vpack.c.b16 %v2022, %v2020
        %v2099 = vpack.c.b16 %v2023, %v2021
        %v2100 = vpack.c.b16 %v2026, %v2024
        %v2101 = vpack.c.b16 %v2027, %v2025
        %v2102 = vpack.c.b16 %v2030, %v2028
        %v2103 = vpack.c.b16 %v2031, %v2029
        %v2104 = vpack.c.b16 %v2034, %v2032
        %v2105 = vpack.c.b16 %v2035, %v2033
        %v2106 = vpack.c.b16 %v2038, %v2036
        %v2107 = vpack.c.b16 %v2039, %v2037
        %v2108 = vpack.c.b16 %v2042, %v2040
        %v2109 = vpack.c.b16 %v2043, %v2041
        %v2110 = vpack.c.b16 %v2046, %v2044
        %v2111 = vpack.c.b16 %v2047, %v2045
        %2176 = vmatpush.bf16.msra.mxu0 %v2062
        %2177 = vmatpush.bf16.msra.mxu0 %v2060
        %2178 = vmatpush.bf16.msra.mxu0 %v2058
        %2179 = vmatpush.bf16.msra.mxu0 %v2056
        %2180 = vmatpush.bf16.msra.mxu0 %v2054
        %2181 = vmatpush.bf16.msra.mxu0 %v2052
        %2182 = vmatpush.bf16.msra.mxu0 %v2050
        %2183 = vmatpush.bf16.msra.mxu0 %v2048
        %2184 = vmatmul.bf16.gmra.mxu0 %v1754
        %v2185 = vpop.f32.mrf.mxu0
        %v2186 = vadd.f32 %v1852, %v2185
        %v2187 = vpop.f32.mrf.mxu0
        %v2188 = vadd.f32 %v1852, %v2187
        %2189 = vmatmul.bf16.gmra.mxu0 %v1758
        %v2190 = vpop.f32.mrf.mxu0
        %v2191 = vadd.f32 %v1852, %v2190
        %v2192 = vpop.f32.mrf.mxu0
        %v2193 = vadd.f32 %v1852, %v2192
        %2194 = vmatmul.bf16.gmra.mxu0 %v1762
        %v2195 = vpop.f32.mrf.mxu0
        %v2196 = vadd.f32 %v1852, %v2195
        %v2197 = vpop.f32.mrf.mxu0
        %v2198 = vadd.f32 %v1852, %v2197
        %2199 = vmatmul.bf16.gmra.mxu0 %v1766
        %v2200 = vpop.f32.mrf.mxu0
        %v2201 = vadd.f32 %v1852, %v2200
        %v2202 = vpop.f32.mrf.mxu0
        %v2203 = vadd.f32 %v1852, %v2202
        %2204 = vmatmul.bf16.gmra.mxu0 %v1770
        %v2205 = vpop.f32.mrf.mxu0
        %v2206 = vadd.f32 %v1852, %v2205
        %v2207 = vpop.f32.mrf.mxu0
        %v2208 = vadd.f32 %v1852, %v2207
        %2209 = vmatmul.bf16.gmra.mxu0 %v1774
        %v2210 = vpop.f32.mrf.mxu0
        %v2211 = vadd.f32 %v1852, %v2210
        %v2212 = vpop.f32.mrf.mxu0
        %v2213 = vadd.f32 %v1852, %v2212
        %2214 = vmatmul.bf16.gmra.mxu0 %v1778
        %v2215 = vpop.f32.mrf.mxu0
        %v2216 = vadd.f32 %v1852, %v2215
        %v2217 = vpop.f32.mrf.mxu0
        %v2218 = vadd.f32 %v1852, %v2217
        %2219 = vmatmul.bf16.gmra.mxu0 %v1782
        %v2220 = vpop.f32.mrf.mxu0
        %v2221 = vadd.f32 %v1852, %v2220
        %v2222 = vpop.f32.mrf.mxu0
        %v2223 = vadd.f32 %v1852, %v2222
        %2224 = vdwg.mxu0
        %2225 = vmatpush.bf16.msra.mxu0 %v2078
        %2226 = vmatpush.bf16.msra.mxu0 %v2076
        %2227 = vmatpush.bf16.msra.mxu0 %v2074
        %2228 = vmatpush.bf16.msra.mxu0 %v2072
        %2229 = vmatpush.bf16.msra.mxu0 %v2070
        %2230 = vmatpush.bf16.msra.mxu0 %v2068
        %2231 = vmatpush.bf16.msra.mxu0 %v2066
        %2232 = vmatpush.bf16.msra.mxu0 %v2064
        %2233 = vmatmul.bf16.gmra.mxu0 %v1755
        %v2234 = vpop.f32.mrf.mxu0
        %v2235 = vadd.f32 %v2186, %v2234
        %v2236 = vpop.f32.mrf.mxu0
        %v2237 = vadd.f32 %v2188, %v2236
        %2238 = vmatmul.bf16.gmra.mxu0 %v1759
        %v2239 = vpop.f32.mrf.mxu0
        %v2240 = vadd.f32 %v2191, %v2239
        %v2241 = vpop.f32.mrf.mxu0
        %v2242 = vadd.f32 %v2193, %v2241
        %2243 = vmatmul.bf16.gmra.mxu0 %v1763
        %v2244 = vpop.f32.mrf.mxu0
        %v2245 = vadd.f32 %v2196, %v2244
        %v2246 = vpop.f32.mrf.mxu0
        %v2247 = vadd.f32 %v2198, %v2246
        %2248 = vmatmul.bf16.gmra.mxu0 %v1767
        %v2249 = vpop.f32.mrf.mxu0
        %v2250 = vadd.f32 %v2201, %v2249
        %v2251 = vpop.f32.mrf.mxu0
        %v2252 = vadd.f32 %v2203, %v2251
        %2253 = vmatmul.bf16.gmra.mxu0 %v1771
        %v2254 = vpop.f32.mrf.mxu0
        %v2255 = vadd.f32 %v2206, %v2254
        %v2256 = vpop.f32.mrf.mxu0
        %v2257 = vadd.f32 %v2208, %v2256
        %2258 = vmatmul.bf16.gmra.mxu0 %v1775
        %v2259 = vpop.f32.mrf.mxu0
        %v2260 = vadd.f32 %v2211, %v2259
        %v2261 = vpop.f32.mrf.mxu0
        %v2262 = vadd.f32 %v2213, %v2261
        %2263 = vmatmul.bf16.gmra.mxu0 %v1779
        %v2264 = vpop.f32.mrf.mxu0
        %v2265 = vadd.f32 %v2216, %v2264
        %v2266 = vpop.f32.mrf.mxu0
        %v2267 = vadd.f32 %v2218, %v2266
        %2268 = vmatmul.bf16.gmra.mxu0 %v1783
        %v2269 = vpop.f32.mrf.mxu0
        %v2270 = vadd.f32 %v2221, %v2269
        %v2271 = vpop.f32.mrf.mxu0
        %v2272 = vadd.f32 %v2223, %v2271
        %2273 = vdwg.mxu0
        %2274 = vmatpush.bf16.msra.mxu0 %v2094
        %2275 = vmatpush.bf16.msra.mxu0 %v2092
        %2276 = vmatpush.bf16.msra.mxu0 %v2090
        %2277 = vmatpush.bf16.msra.mxu0 %v2088
        %2278 = vmatpush.bf16.msra.mxu0 %v2086
        %2279 = vmatpush.bf16.msra.mxu0 %v2084
        %2280 = vmatpush.bf16.msra.mxu0 %v2082
        %2281 = vmatpush.bf16.msra.mxu0 %v2080
        %2282 = vmatmul.bf16.gmra.mxu0 %v1756
        %v2283 = vpop.f32.mrf.mxu0
        %v2284 = vadd.f32 %v2235, %v2283
        %v2285 = vpop.f32.mrf.mxu0
        %v2286 = vadd.f32 %v2237, %v2285
        %2287 = vmatmul.bf16.gmra.mxu0 %v1760
        %v2288 = vpop.f32.mrf.mxu0
        %v2289 = vadd.f32 %v2240, %v2288
        %v2290 = vpop.f32.mrf.mxu0
        %v2291 = vadd.f32 %v2242, %v2290
        %2292 = vmatmul.bf16.gmra.mxu0 %v1764
        %v2293 = vpop.f32.mrf.mxu0
        %v2294 = vadd.f32 %v2245, %v2293
        %v2295 = vpop.f32.mrf.mxu0
        %v2296 = vadd.f32 %v2247, %v2295
        %2297 = vmatmul.bf16.gmra.mxu0 %v1768
        %v2298 = vpop.f32.mrf.mxu0
        %v2299 = vadd.f32 %v2250, %v2298
        %v2300 = vpop.f32.mrf.mxu0
        %v2301 = vadd.f32 %v2252, %v2300
        %2302 = vmatmul.bf16.gmra.mxu0 %v1772
        %v2303 = vpop.f32.mrf.mxu0
        %v2304 = vadd.f32 %v2255, %v2303
        %v2305 = vpop.f32.mrf.mxu0
        %v2306 = vadd.f32 %v2257, %v2305
        %2307 = vmatmul.bf16.gmra.mxu0 %v1776
        %v2308 = vpop.f32.mrf.mxu0
        %v2309 = vadd.f32 %v2260, %v2308
        %v2310 = vpop.f32.mrf.mxu0
        %v2311 = vadd.f32 %v2262, %v2310
        %2312 = vmatmul.bf16.gmra.mxu0 %v1780
        %v2313 = vpop.f32.mrf.mxu0
        %v2314 = vadd.f32 %v2265, %v2313
        %v2315 = vpop.f32.mrf.mxu0
        %v2316 = vadd.f32 %v2267, %v2315
        %2317 = vmatmul.bf16.gmra.mxu0 %v1784
        %v2318 = vpop.f32.mrf.mxu0
        %v2319 = vadd.f32 %v2270, %v2318
        %v2320 = vpop.f32.mrf.mxu0
        %v2321 = vadd.f32 %v2272, %v2320
        %2322 = vdwg.mxu0
        %2323 = vmatpush.bf16.msra.mxu0 %v2110
        %2324 = vmatpush.bf16.msra.mxu0 %v2108
        %2325 = vmatpush.bf16.msra.mxu0 %v2106
        %2326 = vmatpush.bf16.msra.mxu0 %v2104
        %2327 = vmatpush.bf16.msra.mxu0 %v2102
        %2328 = vmatpush.bf16.msra.mxu0 %v2100
        %2329 = vmatpush.bf16.msra.mxu0 %v2098
        %2330 = vmatpush.bf16.msra.mxu0 %v2096
        %2331 = vmatmul.bf16.gmra.mxu0 %v1757
        %v2332 = vpop.f32.mrf.mxu0
        %v2333 = vadd.f32 %v2284, %v2332
        %v2334 = vpop.f32.mrf.mxu0
        %v2335 = vadd.f32 %v2286, %v2334
        %2336 = vmatmul.bf16.gmra.mxu0 %v1761
        %v2337 = vpop.f32.mrf.mxu0
        %v2338 = vadd.f32 %v2289, %v2337
        %v2339 = vpop.f32.mrf.mxu0
        %v2340 = vadd.f32 %v2291, %v2339
        %2341 = vmatmul.bf16.gmra.mxu0 %v1765
        %v2342 = vpop.f32.mrf.mxu0
        %v2343 = vadd.f32 %v2294, %v2342
        %v2344 = vpop.f32.mrf.mxu0
        %v2345 = vadd.f32 %v2296, %v2344
        %2346 = vmatmul.bf16.gmra.mxu0 %v1769
        %v2347 = vpop.f32.mrf.mxu0
        %v2348 = vadd.f32 %v2299, %v2347
        %v2349 = vpop.f32.mrf.mxu0
        %v2350 = vadd.f32 %v2301, %v2349
        %2351 = vmatmul.bf16.gmra.mxu0 %v1773
        %v2352 = vpop.f32.mrf.mxu0
        %v2353 = vadd.f32 %v2304, %v2352
        %v2354 = vpop.f32.mrf.mxu0
        %v2355 = vadd.f32 %v2306, %v2354
        %2356 = vmatmul.bf16.gmra.mxu0 %v1777
        %v2357 = vpop.f32.mrf.mxu0
        %v2358 = vadd.f32 %v2309, %v2357
        %v2359 = vpop.f32.mrf.mxu0
        %v2360 = vadd.f32 %v2311, %v2359
        %2361 = vmatmul.bf16.gmra.mxu0 %v1781
        %v2362 = vpop.f32.mrf.mxu0
        %v2363 = vadd.f32 %v2314, %v2362
        %v2364 = vpop.f32.mrf.mxu0
        %v2365 = vadd.f32 %v2316, %v2364
        %2366 = vmatmul.bf16.gmra.mxu0 %v1785
        %v2367 = vpop.f32.mrf.mxu0
        %v2368 = vadd.f32 %v2319, %v2367
        %v2369 = vpop.f32.mrf.mxu0
        %v2370 = vadd.f32 %v2321, %v2369
        %2371 = vdwg.mxu0
        %2372 = vmatpush.bf16.msra.mxu0 %v2063
        %2373 = vmatpush.bf16.msra.mxu0 %v2061
        %2374 = vmatpush.bf16.msra.mxu0 %v2059
        %2375 = vmatpush.bf16.msra.mxu0 %v2057
        %2376 = vmatpush.bf16.msra.mxu0 %v2055
        %2377 = vmatpush.bf16.msra.mxu0 %v2053
        %2378 = vmatpush.bf16.msra.mxu0 %v2051
        %2379 = vmatpush.bf16.msra.mxu0 %v2049
        %2380 = vmatmul.bf16.gmra.mxu0 %v1754
        %v2381 = vpop.f32.mrf.mxu0
        %v2382 = vadd.f32 %v1853, %v2381
        %v2383 = vpop.f32.mrf.mxu0
        %v2384 = vadd.f32 %v1853, %v2383
        %2385 = vmatmul.bf16.gmra.mxu0 %v1758
        %v2386 = vpop.f32.mrf.mxu0
        %v2387 = vadd.f32 %v1853, %v2386
        %v2388 = vpop.f32.mrf.mxu0
        %v2389 = vadd.f32 %v1853, %v2388
        %2390 = vmatmul.bf16.gmra.mxu0 %v1762
        %v2391 = vpop.f32.mrf.mxu0
        %v2392 = vadd.f32 %v1853, %v2391
        %v2393 = vpop.f32.mrf.mxu0
        %v2394 = vadd.f32 %v1853, %v2393
        %2395 = vmatmul.bf16.gmra.mxu0 %v1766
        %v2396 = vpop.f32.mrf.mxu0
        %v2397 = vadd.f32 %v1853, %v2396
        %v2398 = vpop.f32.mrf.mxu0
        %v2399 = vadd.f32 %v1853, %v2398
        %2400 = vmatmul.bf16.gmra.mxu0 %v1770
        %v2401 = vpop.f32.mrf.mxu0
        %v2402 = vadd.f32 %v1853, %v2401
        %v2403 = vpop.f32.mrf.mxu0
        %v2404 = vadd.f32 %v1853, %v2403
        %2405 = vmatmul.bf16.gmra.mxu0 %v1774
        %v2406 = vpop.f32.mrf.mxu0
        %v2407 = vadd.f32 %v1853, %v2406
        %v2408 = vpop.f32.mrf.mxu0
        %v2409 = vadd.f32 %v1853, %v2408
        %2410 = vmatmul.bf16.gmra.mxu0 %v1778
        %v2411 = vpop.f32.mrf.mxu0
        %v2412 = vadd.f32 %v1853, %v2411
        %v2413 = vpop.f32.mrf.mxu0
        %v2414 = vadd.f32 %v1853, %v2413
        %2415 = vmatmul.bf16.gmra.mxu0 %v1782
        %v2416 = vpop.f32.mrf.mxu0
        %v2417 = vadd.f32 %v1853, %v2416
        %v2418 = vpop.f32.mrf.mxu0
        %v2419 = vadd.f32 %v1853, %v2418
        %2420 = vdwg.mxu0
        %2421 = vmatpush.bf16.msra.mxu0 %v2079
        %2422 = vmatpush.bf16.msra.mxu0 %v2077
        %2423 = vmatpush.bf16.msra.mxu0 %v2075
        %2424 = vmatpush.bf16.msra.mxu0 %v2073
        %2425 = vmatpush.bf16.msra.mxu0 %v2071
        %2426 = vmatpush.bf16.msra.mxu0 %v2069
        %2427 = vmatpush.bf16.msra.mxu0 %v2067
        %2428 = vmatpush.bf16.msra.mxu0 %v2065
        %2429 = vmatmul.bf16.gmra.mxu0 %v1755
        %v2430 = vpop.f32.mrf.mxu0
        %v2431 = vadd.f32 %v2382, %v2430
        %v2432 = vpop.f32.mrf.mxu0
        %v2433 = vadd.f32 %v2384, %v2432
        %2434 = vmatmul.bf16.gmra.mxu0 %v1759
        %v2435 = vpop.f32.mrf.mxu0
        %v2436 = vadd.f32 %v2387, %v2435
        %v2437 = vpop.f32.mrf.mxu0
        %v2438 = vadd.f32 %v2389, %v2437
        %2439 = vmatmul.bf16.gmra.mxu0 %v1763
        %v2440 = vpop.f32.mrf.mxu0
        %v2441 = vadd.f32 %v2392, %v2440
        %v2442 = vpop.f32.mrf.mxu0
        %v2443 = vadd.f32 %v2394, %v2442
        %2444 = vmatmul.bf16.gmra.mxu0 %v1767
        %v2445 = vpop.f32.mrf.mxu0
        %v2446 = vadd.f32 %v2397, %v2445
        %v2447 = vpop.f32.mrf.mxu0
        %v2448 = vadd.f32 %v2399, %v2447
        %2449 = vmatmul.bf16.gmra.mxu0 %v1771
        %v2450 = vpop.f32.mrf.mxu0
        %v2451 = vadd.f32 %v2402, %v2450
        %v2452 = vpop.f32.mrf.mxu0
        %v2453 = vadd.f32 %v2404, %v2452
        %2454 = vmatmul.bf16.gmra.mxu0 %v1775
        %v2455 = vpop.f32.mrf.mxu0
        %v2456 = vadd.f32 %v2407, %v2455
        %v2457 = vpop.f32.mrf.mxu0
        %v2458 = vadd.f32 %v2409, %v2457
        %2459 = vmatmul.bf16.gmra.mxu0 %v1779
        %v2460 = vpop.f32.mrf.mxu0
        %v2461 = vadd.f32 %v2412, %v2460
        %v2462 = vpop.f32.mrf.mxu0
        %v2463 = vadd.f32 %v2414, %v2462
        %2464 = vmatmul.bf16.gmra.mxu0 %v1783
        %v2465 = vpop.f32.mrf.mxu0
        %v2466 = vadd.f32 %v2417, %v2465
        %v2467 = vpop.f32.mrf.mxu0
        %v2468 = vadd.f32 %v2419, %v2467
        %2469 = vdwg.mxu0
        %2470 = vmatpush.bf16.msra.mxu0 %v2095
        %2471 = vmatpush.bf16.msra.mxu0 %v2093
        %2472 = vmatpush.bf16.msra.mxu0 %v2091
        %2473 = vmatpush.bf16.msra.mxu0 %v2089
        %2474 = vmatpush.bf16.msra.mxu0 %v2087
        %2475 = vmatpush.bf16.msra.mxu0 %v2085
        %2476 = vmatpush.bf16.msra.mxu0 %v2083
        %2477 = vmatpush.bf16.msra.mxu0 %v2081
        %2478 = vmatmul.bf16.gmra.mxu0 %v1756
        %v2479 = vpop.f32.mrf.mxu0
        %v2480 = vadd.f32 %v2431, %v2479
        %v2481 = vpop.f32.mrf.mxu0
        %v2482 = vadd.f32 %v2433, %v2481
        %2483 = vmatmul.bf16.gmra.mxu0 %v1760
        %v2484 = vpop.f32.mrf.mxu0
        %v2485 = vadd.f32 %v2436, %v2484
        %v2486 = vpop.f32.mrf.mxu0
        %v2487 = vadd.f32 %v2438, %v2486
        %2488 = vmatmul.bf16.gmra.mxu0 %v1764
        %v2489 = vpop.f32.mrf.mxu0
        %v2490 = vadd.f32 %v2441, %v2489
        %v2491 = vpop.f32.mrf.mxu0
        %v2492 = vadd.f32 %v2443, %v2491
        %2493 = vmatmul.bf16.gmra.mxu0 %v1768
        %v2494 = vpop.f32.mrf.mxu0
        %v2495 = vadd.f32 %v2446, %v2494
        %v2496 = vpop.f32.mrf.mxu0
        %v2497 = vadd.f32 %v2448, %v2496
        %2498 = vmatmul.bf16.gmra.mxu0 %v1772
        %v2499 = vpop.f32.mrf.mxu0
        %v2500 = vadd.f32 %v2451, %v2499
        %v2501 = vpop.f32.mrf.mxu0
        %v2502 = vadd.f32 %v2453, %v2501
        %2503 = vmatmul.bf16.gmra.mxu0 %v1776
        %v2504 = vpop.f32.mrf.mxu0
        %v2505 = vadd.f32 %v2456, %v2504
        %v2506 = vpop.f32.mrf.mxu0
        %v2507 = vadd.f32 %v2458, %v2506
        %2508 = vmatmul.bf16.gmra.mxu0 %v1780
        %v2509 = vpop.f32.mrf.mxu0
        %v2510 = vadd.f32 %v2461, %v2509
        %v2511 = vpop.f32.mrf.mxu0
        %v2512 = vadd.f32 %v2463, %v2511
        %2513 = vmatmul.bf16.gmra.mxu0 %v1784
        %v2514 = vpop.f32.mrf.mxu0
        %v2515 = vadd.f32 %v2466, %v2514
        %v2516 = vpop.f32.mrf.mxu0
        %v2517 = vadd.f32 %v2468, %v2516
        %2518 = vdwg.mxu0
        %2519 = vmatpush.bf16.msra.mxu0 %v2111
        %2520 = vmatpush.bf16.msra.mxu0 %v2109
        %2521 = vmatpush.bf16.msra.mxu0 %v2107
        %2522 = vmatpush.bf16.msra.mxu0 %v2105
        %2523 = vmatpush.bf16.msra.mxu0 %v2103
        %2524 = vmatpush.bf16.msra.mxu0 %v2101
        %2525 = vmatpush.bf16.msra.mxu0 %v2099
        %2526 = vmatpush.bf16.msra.mxu0 %v2097
        %2527 = vmatmul.bf16.gmra.mxu0 %v1757
        %v2528 = vpop.f32.mrf.mxu0
        %v2529 = vadd.f32 %v2480, %v2528
        %v2530 = vpop.f32.mrf.mxu0
        %v2531 = vadd.f32 %v2482, %v2530
        %2532 = vmatmul.bf16.gmra.mxu0 %v1761
        %v2533 = vpop.f32.mrf.mxu0
        %v2534 = vadd.f32 %v2485, %v2533
        %v2535 = vpop.f32.mrf.mxu0
        %v2536 = vadd.f32 %v2487, %v2535
        %2537 = vmatmul.bf16.gmra.mxu0 %v1765
        %v2538 = vpop.f32.mrf.mxu0
        %v2539 = vadd.f32 %v2490, %v2538
        %v2540 = vpop.f32.mrf.mxu0
        %v2541 = vadd.f32 %v2492, %v2540
        %2542 = vmatmul.bf16.gmra.mxu0 %v1769
        %v2543 = vpop.f32.mrf.mxu0
        %v2544 = vadd.f32 %v2495, %v2543
        %v2545 = vpop.f32.mrf.mxu0
        %v2546 = vadd.f32 %v2497, %v2545
        %2547 = vmatmul.bf16.gmra.mxu0 %v1773
        %v2548 = vpop.f32.mrf.mxu0
        %v2549 = vadd.f32 %v2500, %v2548
        %v2550 = vpop.f32.mrf.mxu0
        %v2551 = vadd.f32 %v2502, %v2550
        %2552 = vmatmul.bf16.gmra.mxu0 %v1777
        %v2553 = vpop.f32.mrf.mxu0
        %v2554 = vadd.f32 %v2505, %v2553
        %v2555 = vpop.f32.mrf.mxu0
        %v2556 = vadd.f32 %v2507, %v2555
        %2557 = vmatmul.bf16.gmra.mxu0 %v1781
        %v2558 = vpop.f32.mrf.mxu0
        %v2559 = vadd.f32 %v2510, %v2558
        %v2560 = vpop.f32.mrf.mxu0
        %v2561 = vadd.f32 %v2512, %v2560
        %2562 = vmatmul.bf16.gmra.mxu0 %v1785
        %v2563 = vpop.f32.mrf.mxu0
        %v2564 = vadd.f32 %v2515, %v2563
        %v2565 = vpop.f32.mrf.mxu0
        %v2566 = vadd.f32 %v2517, %v2565
        %2567 = vdwg.mxu0
        %v2568 = vunpack.c.l.bf16 %v296
        %v2569 = vunpack.c.h.bf16 %v296
        %v2570 = vunpack.c.l.bf16 %v297
        %v2571 = vunpack.c.h.bf16 %v297
        %v2572 = vunpack.c.l.bf16 %v298
        %v2573 = vunpack.c.h.bf16 %v298
        %v2574 = vunpack.c.l.bf16 %v299
        %v2575 = vunpack.c.h.bf16 %v299
        %v2576 = vunpack.c.l.bf16 %v300
        %v2577 = vunpack.c.h.bf16 %v300
        %v2578 = vunpack.c.l.bf16 %v301
        %v2579 = vunpack.c.h.bf16 %v301
        %v2580 = vunpack.c.l.bf16 %v302
        %v2581 = vunpack.c.h.bf16 %v302
        %v2582 = vunpack.c.l.bf16 %v303
        %v2583 = vunpack.c.h.bf16 %v303
        %v2584 = vunpack.c.l.bf16 %v304
        %v2585 = vunpack.c.h.bf16 %v304
        %v2586 = vunpack.c.l.bf16 %v305
        %v2587 = vunpack.c.h.bf16 %v305
        %v2588 = vunpack.c.l.bf16 %v306
        %v2589 = vunpack.c.h.bf16 %v306
        %v2590 = vunpack.c.l.bf16 %v307
        %v2591 = vunpack.c.h.bf16 %v307
        %v2592 = vunpack.c.l.bf16 %v308
        %v2593 = vunpack.c.h.bf16 %v308
        %v2594 = vunpack.c.l.bf16 %v309
        %v2595 = vunpack.c.h.bf16 %v309
        %v2596 = vunpack.c.l.bf16 %v310
        %v2597 = vunpack.c.h.bf16 %v310
        %v2598 = vunpack.c.l.bf16 %v311
        %v2599 = vunpack.c.h.bf16 %v311
        %v2600 = vadd.f32 %v2333, %v2568
        %v2601 = vadd.f32 %v2529, %v2569
        %v2602 = vadd.f32 %v2335, %v2570
        %v2603 = vadd.f32 %v2531, %v2571
        %v2604 = vadd.f32 %v2338, %v2572
        %v2605 = vadd.f32 %v2534, %v2573
        %v2606 = vadd.f32 %v2340, %v2574
        %v2607 = vadd.f32 %v2536, %v2575
        %v2608 = vadd.f32 %v2343, %v2576
        %v2609 = vadd.f32 %v2539, %v2577
        %v2610 = vadd.f32 %v2345, %v2578
        %v2611 = vadd.f32 %v2541, %v2579
        %v2612 = vadd.f32 %v2348, %v2580
        %v2613 = vadd.f32 %v2544, %v2581
        %v2614 = vadd.f32 %v2350, %v2582
        %v2615 = vadd.f32 %v2546, %v2583
        %v2616 = vadd.f32 %v2353, %v2584
        %v2617 = vadd.f32 %v2549, %v2585
        %v2618 = vadd.f32 %v2355, %v2586
        %v2619 = vadd.f32 %v2551, %v2587
        %v2620 = vadd.f32 %v2358, %v2588
        %v2621 = vadd.f32 %v2554, %v2589
        %v2622 = vadd.f32 %v2360, %v2590
        %v2623 = vadd.f32 %v2556, %v2591
        %v2624 = vadd.f32 %v2363, %v2592
        %v2625 = vadd.f32 %v2559, %v2593
        %v2626 = vadd.f32 %v2365, %v2594
        %v2627 = vadd.f32 %v2561, %v2595
        %v2628 = vadd.f32 %v2368, %v2596
        %v2629 = vadd.f32 %v2564, %v2597
        %v2630 = vadd.f32 %v2370, %v2598
        %v2631 = vadd.f32 %v2566, %v2599
        %v2632 = vpack.c.bf16 %v2601, %v2600
        %v2633 = vpack.c.bf16 %v2603, %v2602
        %v2634 = vpack.c.bf16 %v2605, %v2604
        %v2635 = vpack.c.bf16 %v2607, %v2606
        %v2636 = vpack.c.bf16 %v2609, %v2608
        %v2637 = vpack.c.bf16 %v2611, %v2610
        %v2638 = vpack.c.bf16 %v2613, %v2612
        %v2639 = vpack.c.bf16 %v2615, %v2614
        %v2640 = vpack.c.bf16 %v2617, %v2616
        %v2641 = vpack.c.bf16 %v2619, %v2618
        %v2642 = vpack.c.bf16 %v2621, %v2620
        %v2643 = vpack.c.bf16 %v2623, %v2622
        %v2644 = vpack.c.bf16 %v2625, %v2624
        %v2645 = vpack.c.bf16 %v2627, %v2626
        %v2646 = vpack.c.bf16 %v2629, %v2628
        %v2647 = vpack.c.bf16 %v2631, %v2630
        %2648 = vst [vmem:[%s293] sm:$0xff] %v2632
        %2649 = vst [vmem:[%s293 + $0x8] sm:$0xff] %v2633
        %2650 = vst [vmem:[%s293 + $0x10] sm:$0xff] %v2634
        %2651 = vst [vmem:[%s293 + $0x18] sm:$0xff] %v2635
        %2652 = vst [vmem:[%s293 + $0x20] sm:$0xff] %v2636
        %2653 = vst [vmem:[%s293 + $0x28] sm:$0xff] %v2637
        %2654 = vst [vmem:[%s293 + $0x30] sm:$0xff] %v2638
        %2655 = vst [vmem:[%s293 + $0x38] sm:$0xff] %v2639
        %2656 = vst [vmem:[%s293 + $0x40] sm:$0xff] %v2640
        %2657 = vst [vmem:[%s293 + $0x48] sm:$0xff] %v2641
        %2658 = vst [vmem:[%s293 + $0x50] sm:$0xff] %v2642
        %2659 = vst [vmem:[%s293 + $0x58] sm:$0xff] %v2643
        %2660 = vst [vmem:[%s293 + $0x60] sm:$0xff] %v2644
        %2661 = vst [vmem:[%s293 + $0x68] sm:$0xff] %v2645
        %2662 = vst [vmem:[%s293 + $0x70] sm:$0xff] %v2646
        %2663 = vst [vmem:[%s293 + $0x78] sm:$0xff] %v2647
        %s2664 = sand.u32 %s142, 1
        %s2665 = scalar_lea.sflag [#allocation4], %s2664
        %s2666 = sand.u32 %s142, 1
        %s2667 = smul.addr %s2666, 128
        %s2668 = scalar_lea.vmem [#allocation10], %s2667
        // Predicated region
        $region57: #{tpu_custom_call.1} parent=39 // pred_check
          %p2669 = pneg %p152
        $region58: #{tpu_custom_call.1} parent=39 // pred_check_branch
          %2671 = sbr.rel (%p2669) target = $region60
        $region59: #{tpu_custom_call.1} parent=39 // pred_region
          %s2672 = smul.u32 16, %s24
          %2674 = vsyncadd %s2665, 0
          %s2675 = smul.addr %s2672, 2
          %s2676 = smul.addr %s2675, 4
          %s2677 = scalar_lea.hbm %s5, %s2676
          %s2678 = sshll.u32 %s2668, 4
          %s2679 = int_to_ptr.vmem [resolvable:$true] %s2678
          %s2680 = sshll.u32 %s2677, 4
          %s2681 = int_to_ptr.hbm [resolvable:$true] %s2680
          %2686 = dma.vmem_to_hbm [thread:$0]  %s2679, 2048, %s2681, %s2665, 128, 128, 8
        $region60: #{tpu_custom_call.1} parent=39 // pred_fallthru
          _
      $region40: #{tpu_custom_call.1} parent=5 // pred_fallthru
        _
      %p2687 = scmp.le.s32.totalorder 2, %s19
      // Predicated region
      $region61: #{tpu_custom_call.1} parent=5 // pred_check
        %p2688 = pneg %p2687
      $region62: #{tpu_custom_call.1} parent=5 // pred_check_branch
        %2690 = sbr.rel (%p2688) target = $region64
      $region63: #{tpu_custom_call.1} parent=5 // pred_region
        %s2691 = ssub.s32 %s19, 2
        // Predicated region
        $region65: #{tpu_custom_call.1} parent=63 // pred_check
          %p2692 = pneg %p158
        $region66: #{tpu_custom_call.1} parent=63 // pred_check_branch
          %2694 = sbr.rel (%p2692) target = $region68
        $region67: #{tpu_custom_call.1} parent=63 // pred_region
          %s2695 = sand.u32 %s143, 1
          %s2696 = scalar_lea.sflag [#allocation4], %s2695
          %s2697 = sand.u32 %s143, 1
          %s2698 = smul.addr %s2697, 128
          %s2699 = scalar_lea.vmem [#allocation10], %s2698
          %2701 = dma.done %s2696, 2048
        $region68: #{tpu_custom_call.1} parent=63 // pred_fallthru
          _
      $region64: #{tpu_custom_call.1} parent=5 // pred_fallthru
        _
    $region6: #{tpu_custom_call.1} parent=1 // loop_footer
      %s23 = sadd.s32 1, %s19
    $region7: #{tpu_custom_call.1} parent=1 // loop_footer_branch
      %18 = sbr.rel target = $region3
    $region8: #{tpu_custom_call.1} parent=1 // loop_exit
      _
    %2702 = vsyncpa [#allocation3], 1
    %s2703 = scalar_lea.sflag [#allocation3], 1
    %2704 = vsyncpa %s2703, 1
    %2705 = vsyncpa [#allocation6], 1
    %2706 = vsyncpa [#allocation9], 1
    %2707 = vsyncpa [#allocation4], 1
    %s2708 = scalar_lea.sflag [#allocation4], 1
    %2709 = vsyncpa %s2708, 1

</llo_original>
